<compile_context>
chip_gen: v7x
topology: tpu7x:2x2x1
jax: 0.10.0
libtpu: 0.0.40
codegen_flags: <defaults>
</compile_context>

<pallas_src>
import functools

import jax
import jax.numpy as jnp
from jax import lax
from jax.experimental import pallas as pl
from jax.experimental.pallas import tpu as pltpu


def _round_up(x, m):
    return (x + m - 1) // m * m


def _rnn_chunk_kernel(
    xwb_ref,    # (Tc, Bp, Hp)  precomputed x@Wx + b0 for this time chunk (f32)
    s0_ref,     # (1, Bp, Hp)   initial state (f32)
    wh_ref,     # (Hp, Hp)      recurrent weight (f32 or bf16)
    w12_ref,    # (Hp, 2*Hp)    concat([W1, W2], axis=1)
    b12_ref,    # (1, 2*Hp)     concat([b1, b2], axis=1) (f32)
    w3_ref,     # (Hp, Hp)
    b3_ref,     # (1, Hp)       (f32)
    out_ref,    # (Tc, Bp, Hp)  per-chunk outputs (f32)
    state_scr,  # VMEM (Bp, Hp) f32 : recurrent state carried across grid steps
):
    c = pl.program_id(0)

    @pl.when(c == 0)
    def _():
        state_scr[...] = s0_ref[0].astype(jnp.float32)

    hp = wh_ref.shape[0]
    tc = xwb_ref.shape[0]
    w_dtype = wh_ref.dtype

    # Biases are tiny; hoist the loads/broadcasts out of the unrolled loop.
    b12 = b12_ref[...]
    b3 = b3_ref[...]

    def step(i, s):
        xwb = xwb_ref[i]                                        # (Bp, Hp) f32
        h0 = jnp.tanh(
            xwb
            + jnp.dot(s.astype(w_dtype), wh_ref[...],
                      preferred_element_type=jnp.float32))
        # Fused h0 fan-out: one (Bp,Hp)x(Hp,2Hp) MXU push for both W1 and W2.
        h12 = jnp.dot(h0.astype(w_dtype), w12_ref[...],
                      preferred_element_type=jnp.float32) + b12
        h1 = jax.nn.sigmoid(h12[:, :hp])
        h2 = jnp.maximum(h12[:, hp:], 0.0)
        h3 = jnp.tanh(
            jnp.dot(h1.astype(w_dtype), w3_ref[...],
                    preferred_element_type=jnp.float32) + b3)
        out = (h2 + h3) * 0.5                                   # mean of the two leaves
        out_ref[i] = out.astype(out_ref.dtype)
        return out                                              # next state == output

    s_fin = lax.fori_loop(0, tc, step, state_scr[...], unroll=True)
    state_scr[...] = s_fin


@functools.partial(jax.jit, static_argnames=("time_chunk", "weight_dtype"))
def rnn_search_forward(inputs_tensor, state_tensor, params, *,
                       time_chunk=8, weight_dtype=jnp.float32):
    """inputs_tensor: (T, B, Cin) f32; state_tensor: (1, B, H) f32."""
    T, B, Cin = inputs_tensor.shape
    H = state_tensor.shape[-1]
    (wx, wh, b0, w1, b1, w2, b2, w3, b3) = params

    # ---- layout: pad B to sublane multiple (8) and H to lane multiple (128) ----
    Bp = _round_up(B, 8)
    Hp = _round_up(H, 128)
    Tc = max(1, min(time_chunk, T))
    Tp = _round_up(T, Tc)
    n_chunks = Tp // Tc

    pad_w = lambda w: jnp.pad(w, ((0, Hp - w.shape[0]), (0, Hp - w.shape[1])))
    pad_b = lambda b: jnp.pad(b, ((0, 0), (0, Hp - b.shape[1])))

    # ---- hoist the input projection (+ b0) out of the recurrence: one big matmul ----
    wx_p = jnp.pad(wx, ((0, 0), (0, Hp - H)))
    xwb = jnp.einsum("tbc,ch->tbh", inputs_tensor, wx_p) + pad_b(b0)   # (T, B, Hp)
    xwb = jnp.pad(xwb, ((0, Tp - T), (0, Bp - B), (0, 0))).astype(jnp.float32)

    s0_p = jnp.pad(state_tensor,
                   ((0, 0), (0, Bp - B), (0, Hp - H))).astype(jnp.float32)

    wh_p = pad_w(wh).astype(weight_dtype)
    w12_p = jnp.concatenate([pad_w(w1), pad_w(w2)], axis=1).astype(weight_dtype)
    b12_p = jnp.concatenate([pad_b(b1), pad_b(b2)], axis=1).astype(jnp.float32)
    w3_p = pad_w(w3).astype(weight_dtype)
    b3_p = pad_b(b3).astype(jnp.float32)

    out_p = pl.pallas_call(
        _rnn_chunk_kernel,
        out_shape=jax.ShapeDtypeStruct((Tp, Bp, Hp), jnp.float32),
        grid_spec=pltpu.PrefetchScalarGridSpec(
            num_scalar_prefetch=0,
            grid=(n_chunks,),
            in_specs=[
                pl.BlockSpec((Tc, Bp, Hp), lambda c: (c, 0, 0)),   # x@Wx + b0 chunk
                pl.BlockSpec((1, Bp, Hp), lambda c: (0, 0, 0)),    # initial state
                # Constant index_map => Pallas does not re-DMA these across steps.
                pl.BlockSpec((Hp, Hp), lambda c: (0, 0)),          # Wh
                pl.BlockSpec((Hp, 2 * Hp), lambda c: (0, 0)),      # [W1 | W2]
                pl.BlockSpec((1, 2 * Hp), lambda c: (0, 0)),       # [b1 | b2]
                pl.BlockSpec((Hp, Hp), lambda c: (0, 0)),          # W3
                pl.BlockSpec((1, Hp), lambda c: (0, 0)),           # b3
            ],
            out_specs=pl.BlockSpec((Tc, Bp, Hp), lambda c: (c, 0, 0)),
            scratch_shapes=[pltpu.VMEM((Bp, Hp), jnp.float32)],
        ),
        compiler_params=pltpu.CompilerParams(
            # Recurrence over time: the single grid axis must run sequentially.
            dimension_semantics=("arbitrary",),
        ),
    )(xwb, s0_p, wh_p, w12_p, b12_p, w3_p, b3_p)

    out = out_p[:T, :B, :H]
    return out, out[-1:]                           # final state == last output


def init_params(key, in_channels, n_channels, init_range=0.025):
    """Matches reset_parameters(): uniform(-0.025, 0.025) on every parameter."""
    ks = jax.random.split(key, 9)
    u = lambda k, shape: jax.random.uniform(
        k, shape, jnp.float32, minval=-init_range, maxval=init_range
    )
    wx = u(ks[0], (in_channels, n_channels))
    wh = u(ks[1], (n_channels, n_channels))
    b0 = u(ks[2], (1, n_channels))
    w1 = u(ks[3], (n_channels, n_channels))
    b1 = u(ks[4], (1, n_channels))
    w2 = u(ks[5], (n_channels, n_channels))
    b2 = u(ks[6], (1, n_channels))
    w3 = u(ks[7], (n_channels, n_channels))
    b3 = u(ks[8], (1, n_channels))
    return (wx, wh, b0, w1, b1, w2, b2, w3, b3)


def _reference_forward(inputs_tensor, state_tensor, params):
    """Pure-JAX reference mirroring RnnSearchModule.forward / .cell semantics."""
    (wx, wh, b0, w1, b1, w2, b2, w3, b3) = params
    state = state_tensor[0]
    outs = []
    for t in range(inputs_tensor.shape[0]):
        x = inputs_tensor[t]
        h0 = jnp.tanh(x @ wx + state @ wh + b0)
        h1 = jax.nn.sigmoid(h0 @ w1 + b1)
        h2 = jnp.maximum(h0 @ w2 + b2, 0.0)
        h3 = jnp.tanh(h1 @ w3 + b3)
        out = jnp.mean(jnp.stack([h2, h3], axis=-1), axis=-1)
        state = out
        outs.append(out)
    return jnp.stack(outs, axis=0), state[None]


if __name__ == "__main__":
    T, B = 8, 4
    in_channels, n_channels = 16, 32

    key = jax.random.PRNGKey(0)
    k_param, k_x = jax.random.split(key)
    params = init_params(k_param, in_channels, n_channels)

    inputs_tensor = jax.random.normal(k_x, (T, B, in_channels), jnp.float32)
    state_tensor = jnp.zeros((1, B, n_channels), jnp.float32)  # init_state(batch_size=B)

    # f32 weights: exact match to the reference.
    out, state_fin = rnn_search_forward(
        inputs_tensor, state_tensor, params, time_chunk=4, weight_dtype=jnp.float32)
    jax.block_until_ready((out, state_fin))

    ref_out, ref_state = _reference_forward(inputs_tensor, state_tensor, params)
    assert out.shape == (T, B, n_channels)
    assert state_fin.shape == (1, B, n_channels)
    assert jnp.allclose(out, ref_out, atol=1e-5, rtol=1e-5)
    assert jnp.allclose(state_fin, ref_state, atol=1e-5, rtol=1e-5)

    # bf16 weights (f32 accumulation): v6e/v7x MXU-rate path, looser tolerance.
    out_bf, state_bf = rnn_search_forward(
        inputs_tensor, state_tensor, params, time_chunk=4, weight_dtype=jnp.bfloat16)
    jax.block_until_ready((out_bf, state_bf))
    assert jnp.allclose(out_bf, ref_out, atol=1e-2)
    assert jnp.allclose(state_bf, ref_state, atol=1e-2)

    print("KERNEL_OK")
</pallas_src>

<mosaic_0001>
module attributes {stable_mosaic.version = 11 : i64} {
  func.func @_rnn_chunk_kernel(%arg0: i32, %arg1: memref<4x8x128xf32, #tpu.memory_space<vmem>>, %arg2: memref<1x8x128xf32, #tpu.memory_space<vmem>>, %arg3: memref<128x128xf32, #tpu.memory_space<vmem>>, %arg4: memref<128x256xf32, #tpu.memory_space<vmem>>, %arg5: memref<1x256xf32, #tpu.memory_space<vmem>>, %arg6: memref<128x128xf32, #tpu.memory_space<vmem>>, %arg7: memref<1x128xf32, #tpu.memory_space<vmem>>, %arg8: memref<4x8x128xf32, #tpu.memory_space<vmem>>, %arg9: memref<8x128xf32, #tpu.memory_space<vmem>>) attributes {dimension_semantics = [#tpu.dimension_semantics<arbitrary>], iteration_bounds = array<i64: 2>, scalar_prefetch = 0 : i64, scratch_operands = 1 : i64, tpu.core_type = #tpu.core_type<tc>, window_params = [{transform_indices = @transform_0, window_bounds = array<i64: 4, 8, 128>}, {pipeline_mode = #tpu.pipeline_mode<synchronous>, transform_indices = @transform_1, window_bounds = array<i64: 1, 8, 128>}, {pipeline_mode = #tpu.pipeline_mode<synchronous>, transform_indices = @transform_2, window_bounds = array<i64: 128, 128>}, {pipeline_mode = #tpu.pipeline_mode<synchronous>, transform_indices = @transform_3, window_bounds = array<i64: 128, 256>}, {pipeline_mode = #tpu.pipeline_mode<synchronous>, transform_indices = @transform_4, window_bounds = array<i64: 1, 256>}, {pipeline_mode = #tpu.pipeline_mode<synchronous>, transform_indices = @transform_5, window_bounds = array<i64: 128, 128>}, {pipeline_mode = #tpu.pipeline_mode<synchronous>, transform_indices = @transform_6, window_bounds = array<i64: 1, 128>}, {transform_indices = @transform_7, window_bounds = array<i64: 4, 8, 128>}]} {
    %c0_i32 = arith.constant 0 : i32
    %0 = arith.cmpi eq, %arg0, %c0_i32 : i32
    %1 = arith.extui %0 : i1 to i32
    %c0_i32_0 = arith.constant 0 : i32
    %2 = arith.cmpi ne, %1, %c0_i32_0 : i32
    scf.if %2 {
      %c0_72 = arith.constant 0 : index
      %c0_73 = arith.constant 0 : index
      %c0_74 = arith.constant 0 : index
      %135 = vector.load %arg2[%c0_72, %c0_73, %c0_74] : memref<1x8x128xf32, #tpu.memory_space<vmem>>, vector<1x8x128xf32>
      %136 = vector.shape_cast %135 : vector<1x8x128xf32> to vector<8x128xf32>
      %c0_75 = arith.constant 0 : index
      %c0_76 = arith.constant 0 : index
      %137 = vector.load %arg9[%c0_75, %c0_76] : memref<8x128xf32, #tpu.memory_space<vmem>>, vector<8x128xf32>
      tpu.vector_store %arg9[%c0_75, %c0_76], %136 {strides = array<i32>} : memref<8x128xf32, #tpu.memory_space<vmem>>, vector<8x128xf32>,
    } else {
    }
    %c0 = arith.constant 0 : index
    %c0_1 = arith.constant 0 : index
    %3 = vector.load %arg5[%c0, %c0_1] : memref<1x256xf32, #tpu.memory_space<vmem>>, vector<1x256xf32>
    %c0_2 = arith.constant 0 : index
    %c0_3 = arith.constant 0 : index
    %4 = vector.load %arg7[%c0_2, %c0_3] : memref<1x128xf32, #tpu.memory_space<vmem>>, vector<1x128xf32>
    %c0_4 = arith.constant 0 : index
    %c0_5 = arith.constant 0 : index
    %5 = vector.load %arg9[%c0_4, %c0_5] : memref<8x128xf32, #tpu.memory_space<vmem>>, vector<8x128xf32>
    %c0_i32_6 = arith.constant 0 : i32
    %6 = arith.index_cast %c0_i32_6 : i32 to index
    %c0_7 = arith.constant 0 : index
    %c0_8 = arith.constant 0 : index
    %7 = vector.load %arg1[%6, %c0_7, %c0_8] : memref<4x8x128xf32, #tpu.memory_space<vmem>>, vector<1x8x128xf32>
    %8 = vector.shape_cast %7 : vector<1x8x128xf32> to vector<8x128xf32>
    %c0_9 = arith.constant 0 : index
    %c0_10 = arith.constant 0 : index
    %9 = vector.load %arg3[%c0_9, %c0_10] : memref<128x128xf32, #tpu.memory_space<vmem>>, vector<128x128xf32>
    %cst = arith.constant dense<0.000000e+00> : vector<8x128xf32>
    %10 = tpu.matmul %5, %9, %cst {dimension_numbers = #tpu.dot_dimension_numbers<[1], [0], [0], [1], [0, 0, 1, 1], [], []>} : vector<8x128xf32>, vector<128x128xf32>, vector<8x128xf32> -> vector<8x128xf32>
    %11 = arith.addf %8, %10 : vector<8x128xf32>
    %12 = math.tanh %11 : vector<8x128xf32>
    %c0_11 = arith.constant 0 : index
    %c0_12 = arith.constant 0 : index
    %13 = vector.load %arg4[%c0_11, %c0_12] : memref<128x256xf32, #tpu.memory_space<vmem>>, vector<128x256xf32>
    %cst_13 = arith.constant dense<0.000000e+00> : vector<8x256xf32>
    %14 = tpu.matmul %12, %13, %cst_13 {dimension_numbers = #tpu.dot_dimension_numbers<[1], [0], [0], [1], [0, 0, 1, 1], [], []>} : vector<8x128xf32>, vector<128x256xf32>, vector<8x256xf32> -> vector<8x256xf32>
    %15 = vector.broadcast %3 : vector<1x256xf32> to vector<8x256xf32>
    %16 = arith.addf %14, %15 : vector<8x256xf32>
    %17 = vector.extract_strided_slice %16 {offsets = [0, 0], sizes = [8, 128], strides = [1, 1]} : vector<8x256xf32> to vector<8x128xf32>
    %18 = arith.negf %17 : vector<8x128xf32>
    %19 = math.exp %18 : vector<8x128xf32>
    %cst_14 = arith.constant 1.000000e+00 : f32
    %20 = vector.broadcast %cst_14 : f32 to vector<8x128xf32>
    %21 = arith.addf %20, %19 : vector<8x128xf32>
    %22 = arith.divf %20, %21 : vector<8x128xf32>
    %23 = vector.extract_strided_slice %16 {offsets = [0, 128], sizes = [8, 128], strides = [1, 1]} : vector<8x256xf32> to vector<8x128xf32>
    %cst_15 = arith.constant 0.000000e+00 : f32
    %24 = vector.broadcast %cst_15 : f32 to vector<8x128xf32>
    %25 = arith.maximumf %23, %24 : vector<8x128xf32>
    %c0_16 = arith.constant 0 : index
    %c0_17 = arith.constant 0 : index
    %26 = vector.load %arg6[%c0_16, %c0_17] : memref<128x128xf32, #tpu.memory_space<vmem>>, vector<128x128xf32>
    %cst_18 = arith.constant dense<0.000000e+00> : vector<8x128xf32>
    %27 = tpu.matmul %22, %26, %cst_18 {dimension_numbers = #tpu.dot_dimension_numbers<[1], [0], [0], [1], [0, 0, 1, 1], [], []>} : vector<8x128xf32>, vector<128x128xf32>, vector<8x128xf32> -> vector<8x128xf32>
    %28 = vector.broadcast %4 : vector<1x128xf32> to vector<8x128xf32>
    %29 = arith.addf %27, %28 : vector<8x128xf32>
    %30 = math.tanh %29 : vector<8x128xf32>
    %31 = arith.addf %25, %30 : vector<8x128xf32>
    %cst_19 = arith.constant 5.000000e-01 : f32
    %32 = vector.broadcast %cst_19 : f32 to vector<8x128xf32>
    %33 = arith.mulf %31, %32 : vector<8x128xf32>
    %34 = arith.index_cast %c0_i32_6 : i32 to index
    %c0_20 = arith.constant 0 : index
    %c0_21 = arith.constant 0 : index
    %35 = vector.load %arg8[%34, %c0_20, %c0_21] : memref<4x8x128xf32, #tpu.memory_space<vmem>>, vector<1x8x128xf32>
    %36 = vector.shape_cast %35 : vector<1x8x128xf32> to vector<8x128xf32>
    %37 = vector.shape_cast %33 : vector<8x128xf32> to vector<1x8x128xf32>
    tpu.vector_store %arg8[%34, %c0_20, %c0_21], %37 {strides = array<i32>} : memref<4x8x128xf32, #tpu.memory_space<vmem>>, vector<1x8x128xf32>,
    %c1_i32 = arith.constant 1 : i32
    %38 = arith.index_cast %c1_i32 : i32 to index
    %c0_22 = arith.constant 0 : index
    %c0_23 = arith.constant 0 : index
    %39 = vector.load %arg1[%38, %c0_22, %c0_23] : memref<4x8x128xf32, #tpu.memory_space<vmem>>, vector<1x8x128xf32>
    %40 = vector.shape_cast %39 : vector<1x8x128xf32> to vector<8x128xf32>
    %c0_24 = arith.constant 0 : index
    %c0_25 = arith.constant 0 : index
    %41 = vector.load %arg3[%c0_24, %c0_25] : memref<128x128xf32, #tpu.memory_space<vmem>>, vector<128x128xf32>
    %cst_26 = arith.constant dense<0.000000e+00> : vector<8x128xf32>
    %42 = tpu.matmul %33, %41, %cst_26 {dimension_numbers = #tpu.dot_dimension_numbers<[1], [0], [0], [1], [0, 0, 1, 1], [], []>} : vector<8x128xf32>, vector<128x128xf32>, vector<8x128xf32> -> vector<8x128xf32>
    %43 = arith.addf %40, %42 : vector<8x128xf32>
    %44 = math.tanh %43 : vector<8x128xf32>
    %c0_27 = arith.constant 0 : index
    %c0_28 = arith.constant 0 : index
    %45 = vector.load %arg4[%c0_27, %c0_28] : memref<128x256xf32, #tpu.memory_space<vmem>>, vector<128x256xf32>
    %cst_29 = arith.constant dense<0.000000e+00> : vector<8x256xf32>
    %46 = tpu.matmul %44, %45, %cst_29 {dimension_numbers = #tpu.dot_dimension_numbers<[1], [0], [0], [1], [0, 0, 1, 1], [], []>} : vector<8x128xf32>, vector<128x256xf32>, vector<8x256xf32> -> vector<8x256xf32>
    %47 = vector.broadcast %3 : vector<1x256xf32> to vector<8x256xf32>
    %48 = arith.addf %46, %47 : vector<8x256xf32>
    %49 = vector.extract_strided_slice %48 {offsets = [0, 0], sizes = [8, 128], strides = [1, 1]} : vector<8x256xf32> to vector<8x128xf32>
    %50 = arith.negf %49 : vector<8x128xf32>
    %51 = math.exp %50 : vector<8x128xf32>
    %cst_30 = arith.constant 1.000000e+00 : f32
    %52 = vector.broadcast %cst_30 : f32 to vector<8x128xf32>
    %53 = arith.addf %52, %51 : vector<8x128xf32>
    %54 = arith.divf %52, %53 : vector<8x128xf32>
    %55 = vector.extract_strided_slice %48 {offsets = [0, 128], sizes = [8, 128], strides = [1, 1]} : vector<8x256xf32> to vector<8x128xf32>
    %cst_31 = arith.constant 0.000000e+00 : f32
    %56 = vector.broadcast %cst_31 : f32 to vector<8x128xf32>
    %57 = arith.maximumf %55, %56 : vector<8x128xf32>
    %c0_32 = arith.constant 0 : index
    %c0_33 = arith.constant 0 : index
    %58 = vector.load %arg6[%c0_32, %c0_33] : memref<128x128xf32, #tpu.memory_space<vmem>>, vector<128x128xf32>
    %cst_34 = arith.constant dense<0.000000e+00> : vector<8x128xf32>
    %59 = tpu.matmul %54, %58, %cst_34 {dimension_numbers = #tpu.dot_dimension_numbers<[1], [0], [0], [1], [0, 0, 1, 1], [], []>} : vector<8x128xf32>, vector<128x128xf32>, vector<8x128xf32> -> vector<8x128xf32>
    %60 = vector.broadcast %4 : vector<1x128xf32> to vector<8x128xf32>
    %61 = arith.addf %59, %60 : vector<8x128xf32>
    %62 = math.tanh %61 : vector<8x128xf32>
    %63 = arith.addf %57, %62 : vector<8x128xf32>
    %cst_35 = arith.constant 5.000000e-01 : f32
    %64 = vector.broadcast %cst_35 : f32 to vector<8x128xf32>
    %65 = arith.mulf %63, %64 : vector<8x128xf32>
    %66 = arith.index_cast %c1_i32 : i32 to index
    %c0_36 = arith.constant 0 : index
    %c0_37 = arith.constant 0 : index
    %67 = vector.load %arg8[%66, %c0_36, %c0_37] : memref<4x8x128xf32, #tpu.memory_space<vmem>>, vector<1x8x128xf32>
    %68 = vector.shape_cast %67 : vector<1x8x128xf32> to vector<8x128xf32>
    %69 = vector.shape_cast %65 : vector<8x128xf32> to vector<1x8x128xf32>
    tpu.vector_store %arg8[%66, %c0_36, %c0_37], %69 {strides = array<i32>} : memref<4x8x128xf32, #tpu.memory_space<vmem>>, vector<1x8x128xf32>,
    %c2_i32 = arith.constant 2 : i32
    %70 = arith.index_cast %c2_i32 : i32 to index
    %c0_38 = arith.constant 0 : index
    %c0_39 = arith.constant 0 : index
    %71 = vector.load %arg1[%70, %c0_38, %c0_39] : memref<4x8x128xf32, #tpu.memory_space<vmem>>, vector<1x8x128xf32>
    %72 = vector.shape_cast %71 : vector<1x8x128xf32> to vector<8x128xf32>
    %c0_40 = arith.constant 0 : index
    %c0_41 = arith.constant 0 : index
    %73 = vector.load %arg3[%c0_40, %c0_41] : memref<128x128xf32, #tpu.memory_space<vmem>>, vector<128x128xf32>
    %cst_42 = arith.constant dense<0.000000e+00> : vector<8x128xf32>
    %74 = tpu.matmul %65, %73, %cst_42 {dimension_numbers = #tpu.dot_dimension_numbers<[1], [0], [0], [1], [0, 0, 1, 1], [], []>} : vector<8x128xf32>, vector<128x128xf32>, vector<8x128xf32> -> vector<8x128xf32>
    %75 = arith.addf %72, %74 : vector<8x128xf32>
    %76 = math.tanh %75 : vector<8x128xf32>
    %c0_43 = arith.constant 0 : index
    %c0_44 = arith.constant 0 : index
    %77 = vector.load %arg4[%c0_43, %c0_44] : memref<128x256xf32, #tpu.memory_space<vmem>>, vector<128x256xf32>
    %cst_45 = arith.constant dense<0.000000e+00> : vector<8x256xf32>
    %78 = tpu.matmul %76, %77, %cst_45 {dimension_numbers = #tpu.dot_dimension_numbers<[1], [0], [0], [1], [0, 0, 1, 1], [], []>} : vector<8x128xf32>, vector<128x256xf32>, vector<8x256xf32> -> vector<8x256xf32>
    %79 = vector.broadcast %3 : vector<1x256xf32> to vector<8x256xf32>
    %80 = arith.addf %78, %79 : vector<8x256xf32>
    %81 = vector.extract_strided_slice %80 {offsets = [0, 0], sizes = [8, 128], strides = [1, 1]} : vector<8x256xf32> to vector<8x128xf32>
    %82 = arith.negf %81 : vector<8x128xf32>
    %83 = math.exp %82 : vector<8x128xf32>
    %cst_46 = arith.constant 1.000000e+00 : f32
    %84 = vector.broadcast %cst_46 : f32 to vector<8x128xf32>
    %85 = arith.addf %84, %83 : vector<8x128xf32>
    %86 = arith.divf %84, %85 : vector<8x128xf32>
    %87 = vector.extract_strided_slice %80 {offsets = [0, 128], sizes = [8, 128], strides = [1, 1]} : vector<8x256xf32> to vector<8x128xf32>
    %cst_47 = arith.constant 0.000000e+00 : f32
    %88 = vector.broadcast %cst_47 : f32 to vector<8x128xf32>
    %89 = arith.maximumf %87, %88 : vector<8x128xf32>
    %c0_48 = arith.constant 0 : index
    %c0_49 = arith.constant 0 : index
    %90 = vector.load %arg6[%c0_48, %c0_49] : memref<128x128xf32, #tpu.memory_space<vmem>>, vector<128x128xf32>
    %cst_50 = arith.constant dense<0.000000e+00> : vector<8x128xf32>
    %91 = tpu.matmul %86, %90, %cst_50 {dimension_numbers = #tpu.dot_dimension_numbers<[1], [0], [0], [1], [0, 0, 1, 1], [], []>} : vector<8x128xf32>, vector<128x128xf32>, vector<8x128xf32> -> vector<8x128xf32>
    %92 = vector.broadcast %4 : vector<1x128xf32> to vector<8x128xf32>
    %93 = arith.addf %91, %92 : vector<8x128xf32>
    %94 = math.tanh %93 : vector<8x128xf32>
    %95 = arith.addf %89, %94 : vector<8x128xf32>
    %cst_51 = arith.constant 5.000000e-01 : f32
    %96 = vector.broadcast %cst_51 : f32 to vector<8x128xf32>
    %97 = arith.mulf %95, %96 : vector<8x128xf32>
    %98 = arith.index_cast %c2_i32 : i32 to index
    %c0_52 = arith.constant 0 : index
    %c0_53 = arith.constant 0 : index
    %99 = vector.load %arg8[%98, %c0_52, %c0_53] : memref<4x8x128xf32, #tpu.memory_space<vmem>>, vector<1x8x128xf32>
    %100 = vector.shape_cast %99 : vector<1x8x128xf32> to vector<8x128xf32>
    %101 = vector.shape_cast %97 : vector<8x128xf32> to vector<1x8x128xf32>
    tpu.vector_store %arg8[%98, %c0_52, %c0_53], %101 {strides = array<i32>} : memref<4x8x128xf32, #tpu.memory_space<vmem>>, vector<1x8x128xf32>,
    %c3_i32 = arith.constant 3 : i32
    %102 = arith.index_cast %c3_i32 : i32 to index
    %c0_54 = arith.constant 0 : index
    %c0_55 = arith.constant 0 : index
    %103 = vector.load %arg1[%102, %c0_54, %c0_55] : memref<4x8x128xf32, #tpu.memory_space<vmem>>, vector<1x8x128xf32>
    %104 = vector.shape_cast %103 : vector<1x8x128xf32> to vector<8x128xf32>
    %c0_56 = arith.constant 0 : index
    %c0_57 = arith.constant 0 : index
    %105 = vector.load %arg3[%c0_56, %c0_57] : memref<128x128xf32, #tpu.memory_space<vmem>>, vector<128x128xf32>
    %cst_58 = arith.constant dense<0.000000e+00> : vector<8x128xf32>
    %106 = tpu.matmul %97, %105, %cst_58 {dimension_numbers = #tpu.dot_dimension_numbers<[1], [0], [0], [1], [0, 0, 1, 1], [], []>} : vector<8x128xf32>, vector<128x128xf32>, vector<8x128xf32> -> vector<8x128xf32>
    %107 = arith.addf %104, %106 : vector<8x128xf32>
    %108 = math.tanh %107 : vector<8x128xf32>
    %c0_59 = arith.constant 0 : index
    %c0_60 = arith.constant 0 : index
    %109 = vector.load %arg4[%c0_59, %c0_60] : memref<128x256xf32, #tpu.memory_space<vmem>>, vector<128x256xf32>
    %cst_61 = arith.constant dense<0.000000e+00> : vector<8x256xf32>
    %110 = tpu.matmul %108, %109, %cst_61 {dimension_numbers = #tpu.dot_dimension_numbers<[1], [0], [0], [1], [0, 0, 1, 1], [], []>} : vector<8x128xf32>, vector<128x256xf32>, vector<8x256xf32> -> vector<8x256xf32>
    %111 = vector.broadcast %3 : vector<1x256xf32> to vector<8x256xf32>
    %112 = arith.addf %110, %111 : vector<8x256xf32>
    %113 = vector.extract_strided_slice %112 {offsets = [0, 0], sizes = [8, 128], strides = [1, 1]} : vector<8x256xf32> to vector<8x128xf32>
    %114 = arith.negf %113 : vector<8x128xf32>
    %115 = math.exp %114 : vector<8x128xf32>
    %cst_62 = arith.constant 1.000000e+00 : f32
    %116 = vector.broadcast %cst_62 : f32 to vector<8x128xf32>
    %117 = arith.addf %116, %115 : vector<8x128xf32>
    %118 = arith.divf %116, %117 : vector<8x128xf32>
    %119 = vector.extract_strided_slice %112 {offsets = [0, 128], sizes = [8, 128], strides = [1, 1]} : vector<8x256xf32> to vector<8x128xf32>
    %cst_63 = arith.constant 0.000000e+00 : f32
    %120 = vector.broadcast %cst_63 : f32 to vector<8x128xf32>
    %121 = arith.maximumf %119, %120 : vector<8x128xf32>
    %c0_64 = arith.constant 0 : index
    %c0_65 = arith.constant 0 : index
    %122 = vector.load %arg6[%c0_64, %c0_65] : memref<128x128xf32, #tpu.memory_space<vmem>>, vector<128x128xf32>
    %cst_66 = arith.constant dense<0.000000e+00> : vector<8x128xf32>
    %123 = tpu.matmul %118, %122, %cst_66 {dimension_numbers = #tpu.dot_dimension_numbers<[1], [0], [0], [1], [0, 0, 1, 1], [], []>} : vector<8x128xf32>, vector<128x128xf32>, vector<8x128xf32> -> vector<8x128xf32>
    %124 = vector.broadcast %4 : vector<1x128xf32> to vector<8x128xf32>
    %125 = arith.addf %123, %124 : vector<8x128xf32>
    %126 = math.tanh %125 : vector<8x128xf32>
    %127 = arith.addf %121, %126 : vector<8x128xf32>
    %cst_67 = arith.constant 5.000000e-01 : f32
    %128 = vector.broadcast %cst_67 : f32 to vector<8x128xf32>
    %129 = arith.mulf %127, %128 : vector<8x128xf32>
    %130 = arith.index_cast %c3_i32 : i32 to index
    %c0_68 = arith.constant 0 : index
    %c0_69 = arith.constant 0 : index
    %131 = vector.load %arg8[%130, %c0_68, %c0_69] : memref<4x8x128xf32, #tpu.memory_space<vmem>>, vector<1x8x128xf32>
    %132 = vector.shape_cast %131 : vector<1x8x128xf32> to vector<8x128xf32>
    %133 = vector.shape_cast %129 : vector<8x128xf32> to vector<1x8x128xf32>
    tpu.vector_store %arg8[%130, %c0_68, %c0_69], %133 {strides = array<i32>} : memref<4x8x128xf32, #tpu.memory_space<vmem>>, vector<1x8x128xf32>,
    %c4_i32 = arith.constant 4 : i32
    %c0_70 = arith.constant 0 : index
    %c0_71 = arith.constant 0 : index
    %134 = vector.load %arg9[%c0_70, %c0_71] : memref<8x128xf32, #tpu.memory_space<vmem>>, vector<8x128xf32>
    tpu.vector_store %arg9[%c0_70, %c0_71], %129 {strides = array<i32>} : memref<8x128xf32, #tpu.memory_space<vmem>>, vector<8x128xf32>,
    return
  }
  func.func @transform_0(%arg0: i32) -> (i32, i32, i32) {
    %c0_i32 = arith.constant 0 : i32
    %c0_i32_0 = arith.constant 0 : i32
    %c0_i32_1 = arith.constant 0 : i32
    return %arg0, %c0_i32, %c0_i32_0 : i32, i32, i32
  }
  func.func @transform_1(%arg0: i32) -> (i32, i32, i32) {
    %c0_i32 = arith.constant 0 : i32
    %c0_i32_0 = arith.constant 0 : i32
    %c0_i32_1 = arith.constant 0 : i32
    %c0_i32_2 = arith.constant 0 : i32
    return %c0_i32, %c0_i32_0, %c0_i32_1 : i32, i32, i32
  }
  func.func @transform_2(%arg0: i32) -> (i32, i32) {
    %c0_i32 = arith.constant 0 : i32
    %c0_i32_0 = arith.constant 0 : i32
    %c0_i32_1 = arith.constant 0 : i32
    return %c0_i32, %c0_i32_0 : i32, i32
  }
  func.func @transform_3(%arg0: i32) -> (i32, i32) {
    %c0_i32 = arith.constant 0 : i32
    %c0_i32_0 = arith.constant 0 : i32
    %c0_i32_1 = arith.constant 0 : i32
    return %c0_i32, %c0_i32_0 : i32, i32
  }
  func.func @transform_4(%arg0: i32) -> (i32, i32) {
    %c0_i32 = arith.constant 0 : i32
    %c0_i32_0 = arith.constant 0 : i32
    %c0_i32_1 = arith.constant 0 : i32
    return %c0_i32, %c0_i32_0 : i32, i32
  }
  func.func @transform_5(%arg0: i32) -> (i32, i32) {
    %c0_i32 = arith.constant 0 : i32
    %c0_i32_0 = arith.constant 0 : i32
    %c0_i32_1 = arith.constant 0 : i32
    return %c0_i32, %c0_i32_0 : i32, i32
  }
  func.func @transform_6(%arg0: i32) -> (i32, i32) {
    %c0_i32 = arith.constant 0 : i32
    %c0_i32_0 = arith.constant 0 : i32
    %c0_i32_1 = arith.constant 0 : i32
    return %c0_i32, %c0_i32_0 : i32, i32
  }
  func.func @transform_7(%arg0: i32) -> (i32, i32, i32) {
    %c0_i32 = arith.constant 0 : i32
    %c0_i32_0 = arith.constant 0 : i32
    %c0_i32_1 = arith.constant 0 : i32
    return %arg0, %c0_i32, %c0_i32_0 : i32, i32, i32
  }
}

</mosaic_0001>

<llo_original>
// kernel: rnn_search_forward.1
$region0: #{rnn_search_forward.1}
  #allocation0 [shape = 'u32[]', space=smem, size = 0x4, offset = 0x4, fixed_abs, tag = 'smem constant byte address 0x4 - core index']
  #allocation1 [shape = 'u32[144,128]{1,0:T(1,128)}', space=vmem, size = 0x12000, scoped, tag = 'internal scratch']
  #allocation2 [shape = 'f32[8,128]{1,0:T(8,128)}', space=vmem, size = 0x1000, scoped, tag = 'scratch operand']
  %s0 = inlined_call_operand.vmem [shape: f32[8,8,128], index: 0, kind: input, shape index: {}]
  %s1 = inlined_call_operand.vmem [shape: f32[1,8,128], index: 1, kind: input, shape index: {}]
  %s2 = inlined_call_operand.vmem [shape: f32[128,128], index: 2, kind: input, shape index: {}]
  %s3 = inlined_call_operand.vmem [shape: f32[128,256], index: 3, kind: input, shape index: {}]
  %s4 = inlined_call_operand.vmem [shape: f32[1,256], index: 4, kind: input, shape index: {}]
  %s5 = inlined_call_operand.vmem [shape: f32[128,128], index: 5, kind: input, shape index: {}]
  %s6 = inlined_call_operand.vmem [shape: f32[1,128], index: 6, kind: input, shape index: {}]
  %s7 = inlined_call_operand.vmem [shape: f32[8,8,128], index: 7, kind: output, shape index: {}]
  %s8 = sld [smem:[#allocation0]]
  $region65: #{rnn_search_forward.1} parent=0
    _
  %s10 = ssub.s32 1, %s8
  %s11 = scalar_select 0, %s10, %s8
  loop: start=0, step=1, limit=4
  $region2: #{rnn_search_forward.1} parent=0 // loop_pre_header
    _
  $region3: #{rnn_search_forward.1} parent=0 // loop_header
    %s13 = sphi 0, %s17
    %p14 = scmp.ge.s32.totalorder %s13, 4
    %s23 = sphi 0, %s25
    %s26 = sphi 0, %s23
    %s27 = sphi 0, %s26
    %s43 = sphi 0, %s27
    %s47 = sphi 0, %s47
    %s49 = sphi 0, %s47
    %s50 = sphi 0, %s49
    %s64 = sphi 0, %s50
    %s68 = sphi 0, %s68
    %s70 = sphi 0, %s68
    %s71 = sphi 0, %s70
    %s85 = sphi 0, %s71
    %s89 = sphi 0, %s89
    %s91 = sphi 0, %s89
    %s92 = sphi 0, %s91
    %s106 = sphi 0, %s92
    %s110 = sphi 0, %s110
    %s112 = sphi 0, %s110
    %s113 = sphi 0, %s112
    %s127 = sphi 0, %s113
    %s131 = sphi 0, %s131
    %s133 = sphi 0, %s131
    %s134 = sphi 0, %s133
    %s148 = sphi 0, %s134
    %s152 = sphi 0, %s152
    %s154 = sphi 0, %s152
    %s155 = sphi 0, %s154
    %s169 = sphi 0, %s155
    %s175 = sphi 0, %s177
    %s178 = sphi 0, %s175
    %s179 = sphi 0, %s178
    %s195 = sphi 0, %s179
  $region4: #{rnn_search_forward.1} parent=0 // loop_header_branch
    %16 = sbr.rel (%p14) target = $region8
  $region5: #{rnn_search_forward.1} parent=0 // loop_body
    %s18 = ssub.s32 %s13, 1
    %s19 = ssub.s32 %s13, 2
    %s20 = sadd.s32 %s13, 1
    %s21 = ssub.s32 %s13, %s20
    %p22 = scmp.eq.s32.totalorder %s21, 0
    %s24 = sadd.s32 %s23, 1
    %s25 = scalar_select %p22, %s23, %s24
    %p28 = pneg %p22
    %p29 = scmp.eq.s32.totalorder %s13, 1
    %p30 = por %p28, %p29
    %p31 = scmp.ne.s32.totalorder %s23, %s26
    %p32 = scmp.eq.s32.totalorder %s13, 0
    %p33 = por %p31, %p32
    %p34 = scmp.ne.s32.totalorder %s23, %s26
    %p35 = scmp.eq.s32.totalorder %s18, 1
    %p36 = por %p34, %p35
    %p37 = scmp.ne.s32.totalorder %s26, %s27
    %p38 = scmp.eq.s32.totalorder %s18, 0
    %p39 = por %p37, %p38
    %p40 = scmp.ne.s32.totalorder %s26, %s27
    %p41 = scmp.eq.s32.totalorder %s19, 1
    %p42 = por %p40, %p41
    %p44 = scmp.ne.s32.totalorder %s27, %s43
    %p45 = scmp.eq.s32.totalorder %s19, 0
    %p46 = por %p44, %p45
    %s48 = sadd.s32 %s47, 1
    %p51 = scmp.eq.s32.totalorder %s13, 1
    %p52 = scmp.ne.s32.totalorder %s47, %s49
    %p53 = scmp.eq.s32.totalorder %s13, 0
    %p54 = por %p52, %p53
    %p55 = scmp.ne.s32.totalorder %s47, %s49
    %p56 = scmp.eq.s32.totalorder %s18, 1
    %p57 = por %p55, %p56
    %p58 = scmp.ne.s32.totalorder %s49, %s50
    %p59 = scmp.eq.s32.totalorder %s18, 0
    %p60 = por %p58, %p59
    %p61 = scmp.ne.s32.totalorder %s49, %s50
    %p62 = scmp.eq.s32.totalorder %s19, 1
    %p63 = por %p61, %p62
    %p65 = scmp.ne.s32.totalorder %s50, %s64
    %p66 = scmp.eq.s32.totalorder %s19, 0
    %p67 = por %p65, %p66
    %s69 = sadd.s32 %s68, 1
    %p72 = scmp.eq.s32.totalorder %s13, 1
    %p73 = scmp.ne.s32.totalorder %s68, %s70
    %p74 = scmp.eq.s32.totalorder %s13, 0
    %p75 = por %p73, %p74
    %p76 = scmp.ne.s32.totalorder %s68, %s70
    %p77 = scmp.eq.s32.totalorder %s18, 1
    %p78 = por %p76, %p77
    %p79 = scmp.ne.s32.totalorder %s70, %s71
    %p80 = scmp.eq.s32.totalorder %s18, 0
    %p81 = por %p79, %p80
    %p82 = scmp.ne.s32.totalorder %s70, %s71
    %p83 = scmp.eq.s32.totalorder %s19, 1
    %p84 = por %p82, %p83
    %p86 = scmp.ne.s32.totalorder %s71, %s85
    %p87 = scmp.eq.s32.totalorder %s19, 0
    %p88 = por %p86, %p87
    %s90 = sadd.s32 %s89, 1
    %p93 = scmp.eq.s32.totalorder %s13, 1
    %p94 = scmp.ne.s32.totalorder %s89, %s91
    %p95 = scmp.eq.s32.totalorder %s13, 0
    %p96 = por %p94, %p95
    %p97 = scmp.ne.s32.totalorder %s89, %s91
    %p98 = scmp.eq.s32.totalorder %s18, 1
    %p99 = por %p97, %p98
    %p100 = scmp.ne.s32.totalorder %s91, %s92
    %p101 = scmp.eq.s32.totalorder %s18, 0
    %p102 = por %p100, %p101
    %p103 = scmp.ne.s32.totalorder %s91, %s92
    %p104 = scmp.eq.s32.totalorder %s19, 1
    %p105 = por %p103, %p104
    %p107 = scmp.ne.s32.totalorder %s92, %s106
    %p108 = scmp.eq.s32.totalorder %s19, 0
    %p109 = por %p107, %p108
    %s111 = sadd.s32 %s110, 1
    %p114 = scmp.eq.s32.totalorder %s13, 1
    %p115 = scmp.ne.s32.totalorder %s110, %s112
    %p116 = scmp.eq.s32.totalorder %s13, 0
    %p117 = por %p115, %p116
    %p118 = scmp.ne.s32.totalorder %s110, %s112
    %p119 = scmp.eq.s32.totalorder %s18, 1
    %p120 = por %p118, %p119
    %p121 = scmp.ne.s32.totalorder %s112, %s113
    %p122 = scmp.eq.s32.totalorder %s18, 0
    %p123 = por %p121, %p122
    %p124 = scmp.ne.s32.totalorder %s112, %s113
    %p125 = scmp.eq.s32.totalorder %s19, 1
    %p126 = por %p124, %p125
    %p128 = scmp.ne.s32.totalorder %s113, %s127
    %p129 = scmp.eq.s32.totalorder %s19, 0
    %p130 = por %p128, %p129
    %s132 = sadd.s32 %s131, 1
    %p135 = scmp.eq.s32.totalorder %s13, 1
    %p136 = scmp.ne.s32.totalorder %s131, %s133
    %p137 = scmp.eq.s32.totalorder %s13, 0
    %p138 = por %p136, %p137
    %p139 = scmp.ne.s32.totalorder %s131, %s133
    %p140 = scmp.eq.s32.totalorder %s18, 1
    %p141 = por %p139, %p140
    %p142 = scmp.ne.s32.totalorder %s133, %s134
    %p143 = scmp.eq.s32.totalorder %s18, 0
    %p144 = por %p142, %p143
    %p145 = scmp.ne.s32.totalorder %s133, %s134
    %p146 = scmp.eq.s32.totalorder %s19, 1
    %p147 = por %p145, %p146
    %p149 = scmp.ne.s32.totalorder %s134, %s148
    %p150 = scmp.eq.s32.totalorder %s19, 0
    %p151 = por %p149, %p150
    %s153 = sadd.s32 %s152, 1
    %p156 = scmp.eq.s32.totalorder %s13, 1
    %p157 = scmp.ne.s32.totalorder %s152, %s154
    %p158 = scmp.eq.s32.totalorder %s13, 0
    %p159 = por %p157, %p158
    %p160 = scmp.ne.s32.totalorder %s152, %s154
    %p161 = scmp.eq.s32.totalorder %s18, 1
    %p162 = por %p160, %p161
    %p163 = scmp.ne.s32.totalorder %s154, %s155
    %p164 = scmp.eq.s32.totalorder %s18, 0
    %p165 = por %p163, %p164
    %p166 = scmp.ne.s32.totalorder %s154, %s155
    %p167 = scmp.eq.s32.totalorder %s19, 1
    %p168 = por %p166, %p167
    %p170 = scmp.ne.s32.totalorder %s155, %s169
    %p171 = scmp.eq.s32.totalorder %s19, 0
    %p172 = por %p170, %p171
    %s173 = ssub.s32 %s13, %s20
    %p174 = scmp.eq.s32.totalorder %s173, 0
    %s176 = sadd.s32 %s175, 1
    %s177 = scalar_select %p174, %s175, %s176
    %p180 = pneg %p174
    %p181 = scmp.eq.s32.totalorder %s13, 1
    %p182 = por %p180, %p181
    %p183 = scmp.ne.s32.totalorder %s175, %s178
    %p184 = scmp.eq.s32.totalorder %s13, 0
    %p185 = por %p183, %p184
    %p186 = scmp.ne.s32.totalorder %s175, %s178
    %p187 = scmp.eq.s32.totalorder %s18, 1
    %p188 = por %p186, %p187
    %p189 = scmp.ne.s32.totalorder %s178, %s179
    %p190 = scmp.eq.s32.totalorder %s18, 0
    %p191 = por %p189, %p190
    %p192 = scmp.ne.s32.totalorder %s178, %s179
    %p193 = scmp.eq.s32.totalorder %s19, 1
    %p194 = por %p192, %p193
    %p196 = scmp.ne.s32.totalorder %s179, %s195
    %p197 = scmp.eq.s32.totalorder %s19, 0
    %p198 = por %p196, %p197
    %p199 = scmp.le.s32.totalorder 1, %s13
    %p200 = scmp.lt.s32.totalorder %s13, 3
    %p201 = pnand %p199, %p200
    %p202 = pneg %p201
    // Predicated region
    $region9: #{rnn_search_forward.1} parent=5 // pred_check
      _
    $region10: #{rnn_search_forward.1} parent=5 // pred_check_branch
      %204 = sbr.rel (%p201) target = $region12
    $region11: #{rnn_search_forward.1} parent=5 // pred_region
      %s205 = ssub.s32 %s13, 1
      // Predicated region
      $region13: #{rnn_search_forward.1} parent=11 // pred_check
        %p206 = pneg %p60
      $region14: #{rnn_search_forward.1} parent=11 // pred_check_branch
        %208 = sbr.rel (%p206) target = $region16
      $region15: #{rnn_search_forward.1} parent=11 // pred_region
        _
      $region16: #{rnn_search_forward.1} parent=11 // pred_fallthru
        _
      // Predicated region
      $region17: #{rnn_search_forward.1} parent=11 // pred_check
        %p209 = pneg %p81
      $region18: #{rnn_search_forward.1} parent=11 // pred_check_branch
        %211 = sbr.rel (%p209) target = $region20
      $region19: #{rnn_search_forward.1} parent=11 // pred_region
        _
      $region20: #{rnn_search_forward.1} parent=11 // pred_fallthru
        _
      // Predicated region
      $region21: #{rnn_search_forward.1} parent=11 // pred_check
        %p212 = pneg %p102
      $region22: #{rnn_search_forward.1} parent=11 // pred_check_branch
        %214 = sbr.rel (%p212) target = $region24
      $region23: #{rnn_search_forward.1} parent=11 // pred_region
        _
      $region24: #{rnn_search_forward.1} parent=11 // pred_fallthru
        _
      // Predicated region
      $region25: #{rnn_search_forward.1} parent=11 // pred_check
        %p215 = pneg %p123
      $region26: #{rnn_search_forward.1} parent=11 // pred_check_branch
        %217 = sbr.rel (%p215) target = $region28
      $region27: #{rnn_search_forward.1} parent=11 // pred_region
        _
      $region28: #{rnn_search_forward.1} parent=11 // pred_fallthru
        _
      // Predicated region
      $region29: #{rnn_search_forward.1} parent=11 // pred_check
        %p218 = pneg %p144
      $region30: #{rnn_search_forward.1} parent=11 // pred_check_branch
        %220 = sbr.rel (%p218) target = $region32
      $region31: #{rnn_search_forward.1} parent=11 // pred_region
        _
      $region32: #{rnn_search_forward.1} parent=11 // pred_fallthru
        _
      // Predicated region
      $region33: #{rnn_search_forward.1} parent=11 // pred_check
        %p221 = pneg %p165
      $region34: #{rnn_search_forward.1} parent=11 // pred_check_branch
        %223 = sbr.rel (%p221) target = $region36
      $region35: #{rnn_search_forward.1} parent=11 // pred_region
        _
      $region36: #{rnn_search_forward.1} parent=11 // pred_fallthru
        _
    $region12: #{rnn_search_forward.1} parent=5 // pred_fallthru
      _
    %p224 = scmp.lt.s32.totalorder %s13, 2
    // Predicated region
    $region37: #{rnn_search_forward.1} parent=5 // pred_check
      %p225 = pneg %p224
    $region38: #{rnn_search_forward.1} parent=5 // pred_check_branch
      %227 = sbr.rel (%p225) target = $region40
    $region39: #{rnn_search_forward.1} parent=5 // pred_region
      // Predicated region
      $region41: #{rnn_search_forward.1} parent=39 // pred_check
        %p228 = pneg %p33
      $region42: #{rnn_search_forward.1} parent=39 // pred_check_branch
        %230 = sbr.rel (%p228) target = $region44
      $region43: #{rnn_search_forward.1} parent=39 // pred_region
        %s231 = smul.u32 4, %s13
        %p232 = scmp.lt.s32.totalorder %s231, 7
        %s233 = scalar_select %p232, %s231, 7
        %s234 = smul.addr %s233, 8
        %s235 = scalar_lea.vmem %s0, %s234
        %s236 = smul.u32 4, %s13
      $region44: #{rnn_search_forward.1} parent=39 // pred_fallthru
        _
    $region40: #{rnn_search_forward.1} parent=5 // pred_fallthru
      _
    %p237 = scmp.le.s32.totalorder 1, %s13
    %p238 = scmp.lt.s32.totalorder %s13, 3
    %p239 = pnand %p237, %p238
    %p240 = pneg %p239
    // Predicated region
    $region45: #{rnn_search_forward.1} parent=5 // pred_check
      _
    $region46: #{rnn_search_forward.1} parent=5 // pred_check_branch
      %242 = sbr.rel (%p239) target = $region48
    $region47: #{rnn_search_forward.1} parent=5 // pred_region
      %s243 = ssub.s32 %s13, 1
      %s244 = smul.u32 4, %s18
      %p245 = scmp.lt.s32.totalorder %s244, 7
      %s246 = scalar_select %p245, %s244, 7
      %s247 = smul.addr %s246, 8
      %s248 = scalar_lea.vmem %s0, %s247
      %p249 = pneg %p39
      %p250 = pneg %p36
      %p251 = pneg %p60
      %p252 = pneg %p57
      %p253 = pneg %p81
      %p254 = pneg %p78
      %p255 = pneg %p102
      %p256 = pneg %p99
      %p257 = pneg %p123
      %p258 = pneg %p120
      %p259 = pneg %p144
      %p260 = pneg %p141
      %p261 = pneg %p165
      %p262 = pneg %p162
      %p263 = pneg %p191
      %p264 = pneg %p188
      %s265 = smul.u32 4, %s18
      %p266 = scmp.lt.s32.totalorder %s265, 7
      %s267 = scalar_select %p266, %s265, 7
      %s268 = smul.addr %s267, 8
      %s269 = scalar_lea.vmem %s7, %s268
      %s270 = smul.u32 4, %s18
      %p271 = scmp.lt.s32.totalorder %s270, 7
      %s272 = scalar_select %p271, %s270, 7
      %s273 = smul.addr %s272, 8
      %s274 = scalar_lea.vmem %s0, %s273
      %s275 = smul.u32 4, %s18
      %s276 = smul.u32 4, %s18
      %p277 = scmp.lt.s32.totalorder %s276, 7
      %s278 = scalar_select %p277, %s276, 7
      %s279 = smul.addr %s278, 8
      %s280 = scalar_lea.vmem %s7, %s279
      %s281 = smul.u32 4, %s18
      %p282 = scmp.eq.s32.totalorder %s18, 0
      // Predicated region
      $region49: #{rnn_search_forward.1} parent=47 // pred_check
        %p283 = pneg %p282
      $region50: #{rnn_search_forward.1} parent=47 // pred_check_branch
        %285 = sbr.rel (%p283) target = $region52
      $region51: #{rnn_search_forward.1} parent=47 // pred_region
        %v286 = vld [vmem:[%s1] sm:$0xff]
        %287 = vst [vmem:[#allocation2] sm:$0xff] %v286
      $region52: #{rnn_search_forward.1} parent=47 // pred_fallthru
        _
      %v288 = vld [vmem:[%s4] sm:$0x3]
      %v289 = vld [vmem:[%s6] sm:$0x1]
      %v290 = vld [vmem:[#allocation2] sm:$0xff]
      %v291 = vld [vmem:[%s274] sm:$0xff]
      %v292 = vld [vmem:[%s2] sm:$0xff]
      %v293 = vld [vmem:[%s2 + $0x8] sm:$0xff]
      %v294 = vld [vmem:[%s2 + $0x10] sm:$0xff]
      %v295 = vld [vmem:[%s2 + $0x18] sm:$0xff]
      %v296 = vld [vmem:[%s2 + $0x20] sm:$0xff]
      %v297 = vld [vmem:[%s2 + $0x28] sm:$0xff]
      %v298 = vld [vmem:[%s2 + $0x30] sm:$0xff]
      %v299 = vld [vmem:[%s2 + $0x38] sm:$0xff]
      %v300 = vld [vmem:[%s2 + $0x40] sm:$0xff]
      %v301 = vld [vmem:[%s2 + $0x48] sm:$0xff]
      %v302 = vld [vmem:[%s2 + $0x50] sm:$0xff]
      %v303 = vld [vmem:[%s2 + $0x58] sm:$0xff]
      %v304 = vld [vmem:[%s2 + $0x60] sm:$0xff]
      %v305 = vld [vmem:[%s2 + $0x68] sm:$0xff]
      %v306 = vld [vmem:[%s2 + $0x70] sm:$0xff]
      %v307 = vld [vmem:[%s2 + $0x78] sm:$0xff]
      %308 = vmatprep.subr.mxu0 0.0
      %309 = vmatpush1.msra.mxu0 %v292
      %310 = vmatprep.subr.mxu0 0.0
      %311 = vmatpush1.msra.mxu0 %v293
      %312 = vmatprep.subr.mxu0 0.0
      %313 = vmatpush1.msra.mxu0 %v294
      %314 = vmatprep.subr.mxu0 0.0
      %315 = vmatpush1.msra.mxu0 %v295
      %316 = vmatprep.subr.mxu0 0.0
      %317 = vmatpush1.msra.mxu0 %v296
      %318 = vmatprep.subr.mxu0 0.0
      %319 = vmatpush1.msra.mxu0 %v297
      %320 = vmatprep.subr.mxu0 0.0
      %321 = vmatpush1.msra.mxu0 %v298
      %322 = vmatprep.subr.mxu0 0.0
      %323 = vmatpush1.msra.mxu0 %v299
      %324 = vmatprep.subr.mxu0 0.0
      %325 = vmatpush1.msra.mxu0 %v300
      %326 = vmatprep.subr.mxu0 0.0
      %327 = vmatpush1.msra.mxu0 %v301
      %328 = vmatprep.subr.mxu0 0.0
      %329 = vmatpush1.msra.mxu0 %v302
      %330 = vmatprep.subr.mxu0 0.0
      %331 = vmatpush1.msra.mxu0 %v303
      %332 = vmatprep.subr.mxu0 0.0
      %333 = vmatpush1.msra.mxu0 %v304
      %334 = vmatprep.subr.mxu0 0.0
      %335 = vmatpush1.msra.mxu0 %v305
      %336 = vmatprep.subr.mxu0 0.0
      %337 = vmatpush1.msra.mxu0 %v306
      %338 = vmatprep.subr.mxu0 0.0
      %339 = vmatpush1.msra.mxu0 %v307
      %340 = vmatprep.subr.mxu0 0.0
      %341 = vmatpush1.msra.mxu0 0.0
      %342 = vmatprep.subr.mxu0 0.0
      %343 = vmatpush1.msra.mxu0 0.0
      %344 = vmatprep.subr.mxu0 0.0
      %345 = vmatpush1.msra.mxu0 0.0
      %346 = vmatprep.subr.mxu0 0.0
      %347 = vmatpush1.msra.mxu0 0.0
      %348 = vmatprep.subr.mxu0 0.0
      %349 = vmatpush1.msra.mxu0 0.0
      %350 = vmatprep.subr.mxu0 0.0
      %351 = vmatpush1.msra.mxu0 0.0
      %352 = vmatprep.subr.mxu0 0.0
      %353 = vmatpush1.msra.mxu0 0.0
      %354 = vmatprep.subr.mxu0 0.0
      %355 = vmatpush1.msra.mxu0 0.0
      %356 = vmatprep.subr.mxu0 0.0
      %357 = vmatpush1.msra.mxu0 0.0
      %358 = vmatprep.subr.mxu0 0.0
      %359 = vmatpush1.msra.mxu0 0.0
      %360 = vmatprep.subr.mxu0 0.0
      %361 = vmatpush1.msra.mxu0 0.0
      %362 = vmatprep.subr.mxu0 0.0
      %363 = vmatpush1.msra.mxu0 0.0
      %364 = vmatprep.subr.mxu0 0.0
      %365 = vmatpush1.msra.mxu0 0.0
      %366 = vmatprep.subr.mxu0 0.0
      %367 = vmatpush1.msra.mxu0 0.0
      %368 = vmatprep.subr.mxu0 0.0
      %369 = vmatpush1.msra.mxu0 0.0
      %370 = vmatprep.subr.mxu0 0.0
      %371 = vmatpush1.msra.mxu0 0.0
      %372 = vmatprep.mubr.f32.mxu0 0.0
      %373 = vmatmul.mubr.f32.gmra.mrb[0].mxu0 %v290
      %v374 = vpop.f32.mrb[0].mxu0
      %v375 = vadd.f32 0.0, %v374
      %v376 = vpop.f32.mrb[0].mxu0
      %377 = vdwg.mxu0
      %v378 = vadd.f32 %v291, %v375
      %v379 = vtanh.pop %v378
      %v380 = vld [vmem:[%s3] sm:$0xff]
      %v381 = vld [vmem:[%s3 + $0x8] sm:$0xff]
      %v382 = vld [vmem:[%s3 + $0x10] sm:$0xff]
      %v383 = vld [vmem:[%s3 + $0x18] sm:$0xff]
      %v384 = vld [vmem:[%s3 + $0x20] sm:$0xff]
      %v385 = vld [vmem:[%s3 + $0x28] sm:$0xff]
      %v386 = vld [vmem:[%s3 + $0x30] sm:$0xff]
      %v387 = vld [vmem:[%s3 + $0x38] sm:$0xff]
      %v388 = vld [vmem:[%s3 + $0x40] sm:$0xff]
      %v389 = vld [vmem:[%s3 + $0x48] sm:$0xff]
      %v390 = vld [vmem:[%s3 + $0x50] sm:$0xff]
      %v391 = vld [vmem:[%s3 + $0x58] sm:$0xff]
      %v392 = vld [vmem:[%s3 + $0x60] sm:$0xff]
      %v393 = vld [vmem:[%s3 + $0x68] sm:$0xff]
      %v394 = vld [vmem:[%s3 + $0x70] sm:$0xff]
      %v395 = vld [vmem:[%s3 + $0x78] sm:$0xff]
      %v396 = vld [vmem:[%s3 + $0x80] sm:$0xff]
      %v397 = vld [vmem:[%s3 + $0x88] sm:$0xff]
      %v398 = vld [vmem:[%s3 + $0x90] sm:$0xff]
      %v399 = vld [vmem:[%s3 + $0x98] sm:$0xff]
      %v400 = vld [vmem:[%s3 + $0xa0] sm:$0xff]
      %v401 = vld [vmem:[%s3 + $0xa8] sm:$0xff]
      %v402 = vld [vmem:[%s3 + $0xb0] sm:$0xff]
      %v403 = vld [vmem:[%s3 + $0xb8] sm:$0xff]
      %v404 = vld [vmem:[%s3 + $0xc0] sm:$0xff]
      %v405 = vld [vmem:[%s3 + $0xc8] sm:$0xff]
      %v406 = vld [vmem:[%s3 + $0xd0] sm:$0xff]
      %v407 = vld [vmem:[%s3 + $0xd8] sm:$0xff]
      %v408 = vld [vmem:[%s3 + $0xe0] sm:$0xff]
      %v409 = vld [vmem:[%s3 + $0xe8] sm:$0xff]
      %v410 = vld [vmem:[%s3 + $0xf0] sm:$0xff]
      %v411 = vld [vmem:[%s3 + $0xf8] sm:$0xff]
      %v413 = vlaneseq
      %v414 = vshrl.u32 %v413, 7
      %v415 = vsub.s32 0, %v414
      %v416 = vrot.slane %v288, %v415
      %v417 = vlaneseq
      %v418 = vshrl.u32 %v417, 7
      %v419 = vsub.s32 1, %v418
      %v420 = vrot.slane %v288, %v419
      %423 = vmatprep.subr.mxu0 %v381
      %424 = vmatpush1.msra.mxu0 %v380
      %425 = vmatprep.subr.mxu0 %v383
      %426 = vmatpush1.msra.mxu0 %v382
      %427 = vmatprep.subr.mxu0 %v385
      %428 = vmatpush1.msra.mxu0 %v384
      %429 = vmatprep.subr.mxu0 %v387
      %430 = vmatpush1.msra.mxu0 %v386
      %431 = vmatprep.subr.mxu0 %v389
      %432 = vmatpush1.msra.mxu0 %v388
      %433 = vmatprep.subr.mxu0 %v391
      %434 = vmatpush1.msra.mxu0 %v390
      %435 = vmatprep.subr.mxu0 %v393
      %436 = vmatpush1.msra.mxu0 %v392
      %437 = vmatprep.subr.mxu0 %v395
      %438 = vmatpush1.msra.mxu0 %v394
      %439 = vmatprep.subr.mxu0 %v397
      %440 = vmatpush1.msra.mxu0 %v396
      %441 = vmatprep.subr.mxu0 %v399
      %442 = vmatpush1.msra.mxu0 %v398
      %443 = vmatprep.subr.mxu0 %v401
      %444 = vmatpush1.msra.mxu0 %v400
      %445 = vmatprep.subr.mxu0 %v403
      %446 = vmatpush1.msra.mxu0 %v402
      %447 = vmatprep.subr.mxu0 %v405
      %448 = vmatpush1.msra.mxu0 %v404
      %449 = vmatprep.subr.mxu0 %v407
      %450 = vmatpush1.msra.mxu0 %v406
      %451 = vmatprep.subr.mxu0 %v409
      %452 = vmatpush1.msra.mxu0 %v408
      %453 = vmatprep.subr.mxu0 %v411
      %454 = vmatpush1.msra.mxu0 %v410
      %455 = vmatprep.subr.mxu0 0.0
      %456 = vmatpush1.msra.mxu0 0.0
      %457 = vmatprep.subr.mxu0 0.0
      %458 = vmatpush1.msra.mxu0 0.0
      %459 = vmatprep.subr.mxu0 0.0
      %460 = vmatpush1.msra.mxu0 0.0
      %461 = vmatprep.subr.mxu0 0.0
      %462 = vmatpush1.msra.mxu0 0.0
      %463 = vmatprep.subr.mxu0 0.0
      %464 = vmatpush1.msra.mxu0 0.0
      %465 = vmatprep.subr.mxu0 0.0
      %466 = vmatpush1.msra.mxu0 0.0
      %467 = vmatprep.subr.mxu0 0.0
      %468 = vmatpush1.msra.mxu0 0.0
      %469 = vmatprep.subr.mxu0 0.0
      %470 = vmatpush1.msra.mxu0 0.0
      %471 = vmatprep.subr.mxu0 0.0
      %472 = vmatpush1.msra.mxu0 0.0
      %473 = vmatprep.subr.mxu0 0.0
      %474 = vmatpush1.msra.mxu0 0.0
      %475 = vmatprep.subr.mxu0 0.0
      %476 = vmatpush1.msra.mxu0 0.0
      %477 = vmatprep.subr.mxu0 0.0
      %478 = vmatpush1.msra.mxu0 0.0
      %479 = vmatprep.subr.mxu0 0.0
      %480 = vmatpush1.msra.mxu0 0.0
      %481 = vmatprep.subr.mxu0 0.0
      %482 = vmatpush1.msra.mxu0 0.0
      %483 = vmatprep.subr.mxu0 0.0
      %484 = vmatpush1.msra.mxu0 0.0
      %485 = vmatprep.subr.mxu0 0.0
      %486 = vmatpush1.msra.mxu0 0.0
      %487 = vmatprep.mubr.f32.mxu0 0.0
      %488 = vmatmul.mubr.f32.gmra.mrb[0].mxu0 %v379
      %v489 = vpop.f32.mrb[0].mxu0
      %v490 = vadd.f32 %v416, %v489
      %v491 = vpop.f32.mrb[0].mxu0
      %v492 = vadd.f32 %v420, %v491
      %493 = vdwg.mxu0
      %v494 = vxor.u32 %v490, 2147483648
      %v495 = vmul.f32 %v494, 1.442695
      %v496 = vpow.pop %v495
      %v497 = vadd.f32 %v496, 1.0
      %v498 = vrcp.pop %v497
      %v499 = vmul.f32 1.0, %v498
      %v500 = vmax.f32 %v492, 0.0
      %v501 = vld [vmem:[%s5] sm:$0xff]
      %v502 = vld [vmem:[%s5 + $0x8] sm:$0xff]
      %v503 = vld [vmem:[%s5 + $0x10] sm:$0xff]
      %v504 = vld [vmem:[%s5 + $0x18] sm:$0xff]
      %v505 = vld [vmem:[%s5 + $0x20] sm:$0xff]
      %v506 = vld [vmem:[%s5 + $0x28] sm:$0xff]
      %v507 = vld [vmem:[%s5 + $0x30] sm:$0xff]
      %v508 = vld [vmem:[%s5 + $0x38] sm:$0xff]
      %v509 = vld [vmem:[%s5 + $0x40] sm:$0xff]
      %v510 = vld [vmem:[%s5 + $0x48] sm:$0xff]
      %v511 = vld [vmem:[%s5 + $0x50] sm:$0xff]
      %v512 = vld [vmem:[%s5 + $0x58] sm:$0xff]
      %v513 = vld [vmem:[%s5 + $0x60] sm:$0xff]
      %v514 = vld [vmem:[%s5 + $0x68] sm:$0xff]
      %v515 = vld [vmem:[%s5 + $0x70] sm:$0xff]
      %v516 = vld [vmem:[%s5 + $0x78] sm:$0xff]
      %v518 = vlaneseq
      %v519 = vshrl.u32 %v518, 7
      %v520 = vsub.s32 0, %v519
      %v521 = vrot.slane %v289, %v520
      %523 = vmatprep.subr.mxu0 0.0
      %524 = vmatpush1.msra.mxu0 %v501
      %525 = vmatprep.subr.mxu0 0.0
      %526 = vmatpush1.msra.mxu0 %v502
      %527 = vmatprep.subr.mxu0 0.0
      %528 = vmatpush1.msra.mxu0 %v503
      %529 = vmatprep.subr.mxu0 0.0
      %530 = vmatpush1.msra.mxu0 %v504
      %531 = vmatprep.subr.mxu0 0.0
      %532 = vmatpush1.msra.mxu0 %v505
      %533 = vmatprep.subr.mxu0 0.0
      %534 = vmatpush1.msra.mxu0 %v506
      %535 = vmatprep.subr.mxu0 0.0
      %536 = vmatpush1.msra.mxu0 %v507
      %537 = vmatprep.subr.mxu0 0.0
      %538 = vmatpush1.msra.mxu0 %v508
      %539 = vmatprep.subr.mxu0 0.0
      %540 = vmatpush1.msra.mxu0 %v509
      %541 = vmatprep.subr.mxu0 0.0
      %542 = vmatpush1.msra.mxu0 %v510
      %543 = vmatprep.subr.mxu0 0.0
      %544 = vmatpush1.msra.mxu0 %v511
      %545 = vmatprep.subr.mxu0 0.0
      %546 = vmatpush1.msra.mxu0 %v512
      %547 = vmatprep.subr.mxu0 0.0
      %548 = vmatpush1.msra.mxu0 %v513
      %549 = vmatprep.subr.mxu0 0.0
      %550 = vmatpush1.msra.mxu0 %v514
      %551 = vmatprep.subr.mxu0 0.0
      %552 = vmatpush1.msra.mxu0 %v515
      %553 = vmatprep.subr.mxu0 0.0
      %554 = vmatpush1.msra.mxu0 %v516
      %555 = vmatprep.subr.mxu0 0.0
      %556 = vmatpush1.msra.mxu0 0.0
      %557 = vmatprep.subr.mxu0 0.0
      %558 = vmatpush1.msra.mxu0 0.0
      %559 = vmatprep.subr.mxu0 0.0
      %560 = vmatpush1.msra.mxu0 0.0
      %561 = vmatprep.subr.mxu0 0.0
      %562 = vmatpush1.msra.mxu0 0.0
      %563 = vmatprep.subr.mxu0 0.0
      %564 = vmatpush1.msra.mxu0 0.0
      %565 = vmatprep.subr.mxu0 0.0
      %566 = vmatpush1.msra.mxu0 0.0
      %567 = vmatprep.subr.mxu0 0.0
      %568 = vmatpush1.msra.mxu0 0.0
      %569 = vmatprep.subr.mxu0 0.0
      %570 = vmatpush1.msra.mxu0 0.0
      %571 = vmatprep.subr.mxu0 0.0
      %572 = vmatpush1.msra.mxu0 0.0
      %573 = vmatprep.subr.mxu0 0.0
      %574 = vmatpush1.msra.mxu0 0.0
      %575 = vmatprep.subr.mxu0 0.0
      %576 = vmatpush1.msra.mxu0 0.0
      %577 = vmatprep.subr.mxu0 0.0
      %578 = vmatpush1.msra.mxu0 0.0
      %579 = vmatprep.subr.mxu0 0.0
      %580 = vmatpush1.msra.mxu0 0.0
      %581 = vmatprep.subr.mxu0 0.0
      %582 = vmatpush1.msra.mxu0 0.0
      %583 = vmatprep.subr.mxu0 0.0
      %584 = vmatpush1.msra.mxu0 0.0
      %585 = vmatprep.subr.mxu0 0.0
      %586 = vmatpush1.msra.mxu0 0.0
      %587 = vmatprep.mubr.f32.mxu0 0.0
      %588 = vmatmul.mubr.f32.gmra.mrb[0].mxu0 %v499
      %v589 = vpop.f32.mrb[0].mxu0
      %v590 = vadd.f32 %v521, %v589
      %v591 = vpop.f32.mrb[0].mxu0
      %592 = vdwg.mxu0
      %v593 = vtanh.pop %v590
      %v594 = vadd.f32 %v500, %v593
      %v595 = vmul.f32 %v594, 0.5
      %596 = vst [vmem:[%s280] sm:$0xff] %v595
      %s597 = scalar_lea.vmem %s274, 8
      %v598 = vld [vmem:[%s597] sm:$0xff]
      %v599 = vld [vmem:[%s2] sm:$0xff]
      %v600 = vld [vmem:[%s2 + $0x8] sm:$0xff]
      %v601 = vld [vmem:[%s2 + $0x10] sm:$0xff]
      %v602 = vld [vmem:[%s2 + $0x18] sm:$0xff]
      %v603 = vld [vmem:[%s2 + $0x20] sm:$0xff]
      %v604 = vld [vmem:[%s2 + $0x28] sm:$0xff]
      %v605 = vld [vmem:[%s2 + $0x30] sm:$0xff]
      %v606 = vld [vmem:[%s2 + $0x38] sm:$0xff]
      %v607 = vld [vmem:[%s2 + $0x40] sm:$0xff]
      %v608 = vld [vmem:[%s2 + $0x48] sm:$0xff]
      %v609 = vld [vmem:[%s2 + $0x50] sm:$0xff]
      %v610 = vld [vmem:[%s2 + $0x58] sm:$0xff]
      %v611 = vld [vmem:[%s2 + $0x60] sm:$0xff]
      %v612 = vld [vmem:[%s2 + $0x68] sm:$0xff]
      %v613 = vld [vmem:[%s2 + $0x70] sm:$0xff]
      %v614 = vld [vmem:[%s2 + $0x78] sm:$0xff]
      %615 = vmatprep.subr.mxu0 0.0
      %616 = vmatpush1.msra.mxu0 %v599
      %617 = vmatprep.subr.mxu0 0.0
      %618 = vmatpush1.msra.mxu0 %v600
      %619 = vmatprep.subr.mxu0 0.0
      %620 = vmatpush1.msra.mxu0 %v601
      %621 = vmatprep.subr.mxu0 0.0
      %622 = vmatpush1.msra.mxu0 %v602
      %623 = vmatprep.subr.mxu0 0.0
      %624 = vmatpush1.msra.mxu0 %v603
      %625 = vmatprep.subr.mxu0 0.0
      %626 = vmatpush1.msra.mxu0 %v604
      %627 = vmatprep.subr.mxu0 0.0
      %628 = vmatpush1.msra.mxu0 %v605
      %629 = vmatprep.subr.mxu0 0.0
      %630 = vmatpush1.msra.mxu0 %v606
      %631 = vmatprep.subr.mxu0 0.0
      %632 = vmatpush1.msra.mxu0 %v607
      %633 = vmatprep.subr.mxu0 0.0
      %634 = vmatpush1.msra.mxu0 %v608
      %635 = vmatprep.subr.mxu0 0.0
      %636 = vmatpush1.msra.mxu0 %v609
      %637 = vmatprep.subr.mxu0 0.0
      %638 = vmatpush1.msra.mxu0 %v610
      %639 = vmatprep.subr.mxu0 0.0
      %640 = vmatpush1.msra.mxu0 %v611
      %641 = vmatprep.subr.mxu0 0.0
      %642 = vmatpush1.msra.mxu0 %v612
      %643 = vmatprep.subr.mxu0 0.0
      %644 = vmatpush1.msra.mxu0 %v613
      %645 = vmatprep.subr.mxu0 0.0
      %646 = vmatpush1.msra.mxu0 %v614
      %647 = vmatprep.subr.mxu0 0.0
      %648 = vmatpush1.msra.mxu0 0.0
      %649 = vmatprep.subr.mxu0 0.0
      %650 = vmatpush1.msra.mxu0 0.0
      %651 = vmatprep.subr.mxu0 0.0
      %652 = vmatpush1.msra.mxu0 0.0
      %653 = vmatprep.subr.mxu0 0.0
      %654 = vmatpush1.msra.mxu0 0.0
      %655 = vmatprep.subr.mxu0 0.0
      %656 = vmatpush1.msra.mxu0 0.0
      %657 = vmatprep.subr.mxu0 0.0
      %658 = vmatpush1.msra.mxu0 0.0
      %659 = vmatprep.subr.mxu0 0.0
      %660 = vmatpush1.msra.mxu0 0.0
      %661 = vmatprep.subr.mxu0 0.0
      %662 = vmatpush1.msra.mxu0 0.0
      %663 = vmatprep.subr.mxu0 0.0
      %664 = vmatpush1.msra.mxu0 0.0
      %665 = vmatprep.subr.mxu0 0.0
      %666 = vmatpush1.msra.mxu0 0.0
      %667 = vmatprep.subr.mxu0 0.0
      %668 = vmatpush1.msra.mxu0 0.0
      %669 = vmatprep.subr.mxu0 0.0
      %670 = vmatpush1.msra.mxu0 0.0
      %671 = vmatprep.subr.mxu0 0.0
      %672 = vmatpush1.msra.mxu0 0.0
      %673 = vmatprep.subr.mxu0 0.0
      %674 = vmatpush1.msra.mxu0 0.0
      %675 = vmatprep.subr.mxu0 0.0
      %676 = vmatpush1.msra.mxu0 0.0
      %677 = vmatprep.subr.mxu0 0.0
      %678 = vmatpush1.msra.mxu0 0.0
      %679 = vmatprep.mubr.f32.mxu0 0.0
      %680 = vmatmul.mubr.f32.gmra.mrb[0].mxu0 %v595
      %v681 = vpop.f32.mrb[0].mxu0
      %v682 = vadd.f32 0.0, %v681
      %v683 = vpop.f32.mrb[0].mxu0
      %684 = vdwg.mxu0
      %v685 = vadd.f32 %v598, %v682
      %v686 = vtanh.pop %v685
      %v687 = vld [vmem:[%s3] sm:$0xff]
      %v688 = vld [vmem:[%s3 + $0x8] sm:$0xff]
      %v689 = vld [vmem:[%s3 + $0x10] sm:$0xff]
      %v690 = vld [vmem:[%s3 + $0x18] sm:$0xff]
      %v691 = vld [vmem:[%s3 + $0x20] sm:$0xff]
      %v692 = vld [vmem:[%s3 + $0x28] sm:$0xff]
      %v693 = vld [vmem:[%s3 + $0x30] sm:$0xff]
      %v694 = vld [vmem:[%s3 + $0x38] sm:$0xff]
      %v695 = vld [vmem:[%s3 + $0x40] sm:$0xff]
      %v696 = vld [vmem:[%s3 + $0x48] sm:$0xff]
      %v697 = vld [vmem:[%s3 + $0x50] sm:$0xff]
      %v698 = vld [vmem:[%s3 + $0x58] sm:$0xff]
      %v699 = vld [vmem:[%s3 + $0x60] sm:$0xff]
      %v700 = vld [vmem:[%s3 + $0x68] sm:$0xff]
      %v701 = vld [vmem:[%s3 + $0x70] sm:$0xff]
      %v702 = vld [vmem:[%s3 + $0x78] sm:$0xff]
      %v703 = vld [vmem:[%s3 + $0x80] sm:$0xff]
      %v704 = vld [vmem:[%s3 + $0x88] sm:$0xff]
      %v705 = vld [vmem:[%s3 + $0x90] sm:$0xff]
      %v706 = vld [vmem:[%s3 + $0x98] sm:$0xff]
      %v707 = vld [vmem:[%s3 + $0xa0] sm:$0xff]
      %v708 = vld [vmem:[%s3 + $0xa8] sm:$0xff]
      %v709 = vld [vmem:[%s3 + $0xb0] sm:$0xff]
      %v710 = vld [vmem:[%s3 + $0xb8] sm:$0xff]
      %v711 = vld [vmem:[%s3 + $0xc0] sm:$0xff]
      %v712 = vld [vmem:[%s3 + $0xc8] sm:$0xff]
      %v713 = vld [vmem:[%s3 + $0xd0] sm:$0xff]
      %v714 = vld [vmem:[%s3 + $0xd8] sm:$0xff]
      %v715 = vld [vmem:[%s3 + $0xe0] sm:$0xff]
      %v716 = vld [vmem:[%s3 + $0xe8] sm:$0xff]
      %v717 = vld [vmem:[%s3 + $0xf0] sm:$0xff]
      %v718 = vld [vmem:[%s3 + $0xf8] sm:$0xff]
      %719 = vmatprep.subr.mxu0 %v688
      %720 = vmatpush1.msra.mxu0 %v687
      %721 = vmatprep.subr.mxu0 %v690
      %722 = vmatpush1.msra.mxu0 %v689
      %723 = vmatprep.subr.mxu0 %v692
      %724 = vmatpush1.msra.mxu0 %v691
      %725 = vmatprep.subr.mxu0 %v694
      %726 = vmatpush1.msra.mxu0 %v693
      %727 = vmatprep.subr.mxu0 %v696
      %728 = vmatpush1.msra.mxu0 %v695
      %729 = vmatprep.subr.mxu0 %v698
      %730 = vmatpush1.msra.mxu0 %v697
      %731 = vmatprep.subr.mxu0 %v700
      %732 = vmatpush1.msra.mxu0 %v699
      %733 = vmatprep.subr.mxu0 %v702
      %734 = vmatpush1.msra.mxu0 %v701
      %735 = vmatprep.subr.mxu0 %v704
      %736 = vmatpush1.msra.mxu0 %v703
      %737 = vmatprep.subr.mxu0 %v706
      %738 = vmatpush1.msra.mxu0 %v705
      %739 = vmatprep.subr.mxu0 %v708
      %740 = vmatpush1.msra.mxu0 %v707
      %741 = vmatprep.subr.mxu0 %v710
      %742 = vmatpush1.msra.mxu0 %v709
      %743 = vmatprep.subr.mxu0 %v712
      %744 = vmatpush1.msra.mxu0 %v711
      %745 = vmatprep.subr.mxu0 %v714
      %746 = vmatpush1.msra.mxu0 %v713
      %747 = vmatprep.subr.mxu0 %v716
      %748 = vmatpush1.msra.mxu0 %v715
      %749 = vmatprep.subr.mxu0 %v718
      %750 = vmatpush1.msra.mxu0 %v717
      %751 = vmatprep.subr.mxu0 0.0
      %752 = vmatpush1.msra.mxu0 0.0
      %753 = vmatprep.subr.mxu0 0.0
      %754 = vmatpush1.msra.mxu0 0.0
      %755 = vmatprep.subr.mxu0 0.0
      %756 = vmatpush1.msra.mxu0 0.0
      %757 = vmatprep.subr.mxu0 0.0
      %758 = vmatpush1.msra.mxu0 0.0
      %759 = vmatprep.subr.mxu0 0.0
      %760 = vmatpush1.msra.mxu0 0.0
      %761 = vmatprep.subr.mxu0 0.0
      %762 = vmatpush1.msra.mxu0 0.0
      %763 = vmatprep.subr.mxu0 0.0
      %764 = vmatpush1.msra.mxu0 0.0
      %765 = vmatprep.subr.mxu0 0.0
      %766 = vmatpush1.msra.mxu0 0.0
      %767 = vmatprep.subr.mxu0 0.0
      %768 = vmatpush1.msra.mxu0 0.0
      %769 = vmatprep.subr.mxu0 0.0
      %770 = vmatpush1.msra.mxu0 0.0
      %771 = vmatprep.subr.mxu0 0.0
      %772 = vmatpush1.msra.mxu0 0.0
      %773 = vmatprep.subr.mxu0 0.0
      %774 = vmatpush1.msra.mxu0 0.0
      %775 = vmatprep.subr.mxu0 0.0
      %776 = vmatpush1.msra.mxu0 0.0
      %777 = vmatprep.subr.mxu0 0.0
      %778 = vmatpush1.msra.mxu0 0.0
      %779 = vmatprep.subr.mxu0 0.0
      %780 = vmatpush1.msra.mxu0 0.0
      %781 = vmatprep.subr.mxu0 0.0
      %782 = vmatpush1.msra.mxu0 0.0
      %783 = vmatprep.mubr.f32.mxu0 0.0
      %784 = vmatmul.mubr.f32.gmra.mrb[0].mxu0 %v686
      %v785 = vpop.f32.mrb[0].mxu0
      %v786 = vadd.f32 %v416, %v785
      %v787 = vpop.f32.mrb[0].mxu0
      %v788 = vadd.f32 %v420, %v787
      %789 = vdwg.mxu0
      %v790 = vxor.u32 %v786, 2147483648
      %v791 = vmul.f32 %v790, 1.442695
      %v792 = vpow.pop %v791
      %v793 = vadd.f32 %v792, 1.0
      %v794 = vrcp.pop %v793
      %v795 = vmul.f32 1.0, %v794
      %v796 = vmax.f32 %v788, 0.0
      %v797 = vld [vmem:[%s5] sm:$0xff]
      %v798 = vld [vmem:[%s5 + $0x8] sm:$0xff]
      %v799 = vld [vmem:[%s5 + $0x10] sm:$0xff]
      %v800 = vld [vmem:[%s5 + $0x18] sm:$0xff]
      %v801 = vld [vmem:[%s5 + $0x20] sm:$0xff]
      %v802 = vld [vmem:[%s5 + $0x28] sm:$0xff]
      %v803 = vld [vmem:[%s5 + $0x30] sm:$0xff]
      %v804 = vld [vmem:[%s5 + $0x38] sm:$0xff]
      %v805 = vld [vmem:[%s5 + $0x40] sm:$0xff]
      %v806 = vld [vmem:[%s5 + $0x48] sm:$0xff]
      %v807 = vld [vmem:[%s5 + $0x50] sm:$0xff]
      %v808 = vld [vmem:[%s5 + $0x58] sm:$0xff]
      %v809 = vld [vmem:[%s5 + $0x60] sm:$0xff]
      %v810 = vld [vmem:[%s5 + $0x68] sm:$0xff]
      %v811 = vld [vmem:[%s5 + $0x70] sm:$0xff]
      %v812 = vld [vmem:[%s5 + $0x78] sm:$0xff]
      %813 = vmatprep.subr.mxu0 0.0
      %814 = vmatpush1.msra.mxu0 %v797
      %815 = vmatprep.subr.mxu0 0.0
      %816 = vmatpush1.msra.mxu0 %v798
      %817 = vmatprep.subr.mxu0 0.0
      %818 = vmatpush1.msra.mxu0 %v799
      %819 = vmatprep.subr.mxu0 0.0
      %820 = vmatpush1.msra.mxu0 %v800
      %821 = vmatprep.subr.mxu0 0.0
      %822 = vmatpush1.msra.mxu0 %v801
      %823 = vmatprep.subr.mxu0 0.0
      %824 = vmatpush1.msra.mxu0 %v802
      %825 = vmatprep.subr.mxu0 0.0
      %826 = vmatpush1.msra.mxu0 %v803
      %827 = vmatprep.subr.mxu0 0.0
      %828 = vmatpush1.msra.mxu0 %v804
      %829 = vmatprep.subr.mxu0 0.0
      %830 = vmatpush1.msra.mxu0 %v805
      %831 = vmatprep.subr.mxu0 0.0
      %832 = vmatpush1.msra.mxu0 %v806
      %833 = vmatprep.subr.mxu0 0.0
      %834 = vmatpush1.msra.mxu0 %v807
      %835 = vmatprep.subr.mxu0 0.0
      %836 = vmatpush1.msra.mxu0 %v808
      %837 = vmatprep.subr.mxu0 0.0
      %838 = vmatpush1.msra.mxu0 %v809
      %839 = vmatprep.subr.mxu0 0.0
      %840 = vmatpush1.msra.mxu0 %v810
      %841 = vmatprep.subr.mxu0 0.0
      %842 = vmatpush1.msra.mxu0 %v811
      %843 = vmatprep.subr.mxu0 0.0
      %844 = vmatpush1.msra.mxu0 %v812
      %845 = vmatprep.subr.mxu0 0.0
      %846 = vmatpush1.msra.mxu0 0.0
      %847 = vmatprep.subr.mxu0 0.0
      %848 = vmatpush1.msra.mxu0 0.0
      %849 = vmatprep.subr.mxu0 0.0
      %850 = vmatpush1.msra.mxu0 0.0
      %851 = vmatprep.subr.mxu0 0.0
      %852 = vmatpush1.msra.mxu0 0.0
      %853 = vmatprep.subr.mxu0 0.0
      %854 = vmatpush1.msra.mxu0 0.0
      %855 = vmatprep.subr.mxu0 0.0
      %856 = vmatpush1.msra.mxu0 0.0
      %857 = vmatprep.subr.mxu0 0.0
      %858 = vmatpush1.msra.mxu0 0.0
      %859 = vmatprep.subr.mxu0 0.0
      %860 = vmatpush1.msra.mxu0 0.0
      %861 = vmatprep.subr.mxu0 0.0
      %862 = vmatpush1.msra.mxu0 0.0
      %863 = vmatprep.subr.mxu0 0.0
      %864 = vmatpush1.msra.mxu0 0.0
      %865 = vmatprep.subr.mxu0 0.0
      %866 = vmatpush1.msra.mxu0 0.0
      %867 = vmatprep.subr.mxu0 0.0
      %868 = vmatpush1.msra.mxu0 0.0
      %869 = vmatprep.subr.mxu0 0.0
      %870 = vmatpush1.msra.mxu0 0.0
      %871 = vmatprep.subr.mxu0 0.0
      %872 = vmatpush1.msra.mxu0 0.0
      %873 = vmatprep.subr.mxu0 0.0
      %874 = vmatpush1.msra.mxu0 0.0
      %875 = vmatprep.subr.mxu0 0.0
      %876 = vmatpush1.msra.mxu0 0.0
      %877 = vmatprep.mubr.f32.mxu0 0.0
      %878 = vmatmul.mubr.f32.gmra.mrb[0].mxu0 %v795
      %v879 = vpop.f32.mrb[0].mxu0
      %v880 = vadd.f32 %v521, %v879
      %v881 = vpop.f32.mrb[0].mxu0
      %882 = vdwg.mxu0
      %v883 = vtanh.pop %v880
      %v884 = vadd.f32 %v796, %v883
      %v885 = vmul.f32 %v884, 0.5
      %s886 = scalar_lea.vmem %s280, 8
      %887 = vst [vmem:[%s886] sm:$0xff] %v885
      %s888 = scalar_lea.vmem %s274, 16
      %v889 = vld [vmem:[%s888] sm:$0xff]
      %v890 = vld [vmem:[%s2] sm:$0xff]
      %v891 = vld [vmem:[%s2 + $0x8] sm:$0xff]
      %v892 = vld [vmem:[%s2 + $0x10] sm:$0xff]
      %v893 = vld [vmem:[%s2 + $0x18] sm:$0xff]
      %v894 = vld [vmem:[%s2 + $0x20] sm:$0xff]
      %v895 = vld [vmem:[%s2 + $0x28] sm:$0xff]
      %v896 = vld [vmem:[%s2 + $0x30] sm:$0xff]
      %v897 = vld [vmem:[%s2 + $0x38] sm:$0xff]
      %v898 = vld [vmem:[%s2 + $0x40] sm:$0xff]
      %v899 = vld [vmem:[%s2 + $0x48] sm:$0xff]
      %v900 = vld [vmem:[%s2 + $0x50] sm:$0xff]
      %v901 = vld [vmem:[%s2 + $0x58] sm:$0xff]
      %v902 = vld [vmem:[%s2 + $0x60] sm:$0xff]
      %v903 = vld [vmem:[%s2 + $0x68] sm:$0xff]
      %v904 = vld [vmem:[%s2 + $0x70] sm:$0xff]
      %v905 = vld [vmem:[%s2 + $0x78] sm:$0xff]
      %906 = vmatprep.subr.mxu0 0.0
      %907 = vmatpush1.msra.mxu0 %v890
      %908 = vmatprep.subr.mxu0 0.0
      %909 = vmatpush1.msra.mxu0 %v891
      %910 = vmatprep.subr.mxu0 0.0
      %911 = vmatpush1.msra.mxu0 %v892
      %912 = vmatprep.subr.mxu0 0.0
      %913 = vmatpush1.msra.mxu0 %v893
      %914 = vmatprep.subr.mxu0 0.0
      %915 = vmatpush1.msra.mxu0 %v894
      %916 = vmatprep.subr.mxu0 0.0
      %917 = vmatpush1.msra.mxu0 %v895
      %918 = vmatprep.subr.mxu0 0.0
      %919 = vmatpush1.msra.mxu0 %v896
      %920 = vmatprep.subr.mxu0 0.0
      %921 = vmatpush1.msra.mxu0 %v897
      %922 = vmatprep.subr.mxu0 0.0
      %923 = vmatpush1.msra.mxu0 %v898
      %924 = vmatprep.subr.mxu0 0.0
      %925 = vmatpush1.msra.mxu0 %v899
      %926 = vmatprep.subr.mxu0 0.0
      %927 = vmatpush1.msra.mxu0 %v900
      %928 = vmatprep.subr.mxu0 0.0
      %929 = vmatpush1.msra.mxu0 %v901
      %930 = vmatprep.subr.mxu0 0.0
      %931 = vmatpush1.msra.mxu0 %v902
      %932 = vmatprep.subr.mxu0 0.0
      %933 = vmatpush1.msra.mxu0 %v903
      %934 = vmatprep.subr.mxu0 0.0
      %935 = vmatpush1.msra.mxu0 %v904
      %936 = vmatprep.subr.mxu0 0.0
      %937 = vmatpush1.msra.mxu0 %v905
      %938 = vmatprep.subr.mxu0 0.0
      %939 = vmatpush1.msra.mxu0 0.0
      %940 = vmatprep.subr.mxu0 0.0
      %941 = vmatpush1.msra.mxu0 0.0
      %942 = vmatprep.subr.mxu0 0.0
      %943 = vmatpush1.msra.mxu0 0.0
      %944 = vmatprep.subr.mxu0 0.0
      %945 = vmatpush1.msra.mxu0 0.0
      %946 = vmatprep.subr.mxu0 0.0
      %947 = vmatpush1.msra.mxu0 0.0
      %948 = vmatprep.subr.mxu0 0.0
      %949 = vmatpush1.msra.mxu0 0.0
      %950 = vmatprep.subr.mxu0 0.0
      %951 = vmatpush1.msra.mxu0 0.0
      %952 = vmatprep.subr.mxu0 0.0
      %953 = vmatpush1.msra.mxu0 0.0
      %954 = vmatprep.subr.mxu0 0.0
      %955 = vmatpush1.msra.mxu0 0.0
      %956 = vmatprep.subr.mxu0 0.0
      %957 = vmatpush1.msra.mxu0 0.0
      %958 = vmatprep.subr.mxu0 0.0
      %959 = vmatpush1.msra.mxu0 0.0
      %960 = vmatprep.subr.mxu0 0.0
      %961 = vmatpush1.msra.mxu0 0.0
      %962 = vmatprep.subr.mxu0 0.0
      %963 = vmatpush1.msra.mxu0 0.0
      %964 = vmatprep.subr.mxu0 0.0
      %965 = vmatpush1.msra.mxu0 0.0
      %966 = vmatprep.subr.mxu0 0.0
      %967 = vmatpush1.msra.mxu0 0.0
      %968 = vmatprep.subr.mxu0 0.0
      %969 = vmatpush1.msra.mxu0 0.0
      %970 = vmatprep.mubr.f32.mxu0 0.0
      %971 = vmatmul.mubr.f32.gmra.mrb[0].mxu0 %v885
      %v972 = vpop.f32.mrb[0].mxu0
      %v973 = vadd.f32 0.0, %v972
      %v974 = vpop.f32.mrb[0].mxu0
      %975 = vdwg.mxu0
      %v976 = vadd.f32 %v889, %v973
      %v977 = vtanh.pop %v976
      %v978 = vld [vmem:[%s3] sm:$0xff]
      %v979 = vld [vmem:[%s3 + $0x8] sm:$0xff]
      %v980 = vld [vmem:[%s3 + $0x10] sm:$0xff]
      %v981 = vld [vmem:[%s3 + $0x18] sm:$0xff]
      %v982 = vld [vmem:[%s3 + $0x20] sm:$0xff]
      %v983 = vld [vmem:[%s3 + $0x28] sm:$0xff]
      %v984 = vld [vmem:[%s3 + $0x30] sm:$0xff]
      %v985 = vld [vmem:[%s3 + $0x38] sm:$0xff]
      %v986 = vld [vmem:[%s3 + $0x40] sm:$0xff]
      %v987 = vld [vmem:[%s3 + $0x48] sm:$0xff]
      %v988 = vld [vmem:[%s3 + $0x50] sm:$0xff]
      %v989 = vld [vmem:[%s3 + $0x58] sm:$0xff]
      %v990 = vld [vmem:[%s3 + $0x60] sm:$0xff]
      %v991 = vld [vmem:[%s3 + $0x68] sm:$0xff]
      %v992 = vld [vmem:[%s3 + $0x70] sm:$0xff]
      %v993 = vld [vmem:[%s3 + $0x78] sm:$0xff]
      %v994 = vld [vmem:[%s3 + $0x80] sm:$0xff]
      %v995 = vld [vmem:[%s3 + $0x88] sm:$0xff]
      %v996 = vld [vmem:[%s3 + $0x90] sm:$0xff]
      %v997 = vld [vmem:[%s3 + $0x98] sm:$0xff]
      %v998 = vld [vmem:[%s3 + $0xa0] sm:$0xff]
      %v999 = vld [vmem:[%s3 + $0xa8] sm:$0xff]
      %v1000 = vld [vmem:[%s3 + $0xb0] sm:$0xff]
      %v1001 = vld [vmem:[%s3 + $0xb8] sm:$0xff]
      %v1002 = vld [vmem:[%s3 + $0xc0] sm:$0xff]
      %v1003 = vld [vmem:[%s3 + $0xc8] sm:$0xff]
      %v1004 = vld [vmem:[%s3 + $0xd0] sm:$0xff]
      %v1005 = vld [vmem:[%s3 + $0xd8] sm:$0xff]
      %v1006 = vld [vmem:[%s3 + $0xe0] sm:$0xff]
      %v1007 = vld [vmem:[%s3 + $0xe8] sm:$0xff]
      %v1008 = vld [vmem:[%s3 + $0xf0] sm:$0xff]
      %v1009 = vld [vmem:[%s3 + $0xf8] sm:$0xff]
      %1010 = vmatprep.subr.mxu0 %v979
      %1011 = vmatpush1.msra.mxu0 %v978
      %1012 = vmatprep.subr.mxu0 %v981
      %1013 = vmatpush1.msra.mxu0 %v980
      %1014 = vmatprep.subr.mxu0 %v983
      %1015 = vmatpush1.msra.mxu0 %v982
      %1016 = vmatprep.subr.mxu0 %v985
      %1017 = vmatpush1.msra.mxu0 %v984
      %1018 = vmatprep.subr.mxu0 %v987
      %1019 = vmatpush1.msra.mxu0 %v986
      %1020 = vmatprep.subr.mxu0 %v989
      %1021 = vmatpush1.msra.mxu0 %v988
      %1022 = vmatprep.subr.mxu0 %v991
      %1023 = vmatpush1.msra.mxu0 %v990
      %1024 = vmatprep.subr.mxu0 %v993
      %1025 = vmatpush1.msra.mxu0 %v992
      %1026 = vmatprep.subr.mxu0 %v995
      %1027 = vmatpush1.msra.mxu0 %v994
      %1028 = vmatprep.subr.mxu0 %v997
      %1029 = vmatpush1.msra.mxu0 %v996
      %1030 = vmatprep.subr.mxu0 %v999
      %1031 = vmatpush1.msra.mxu0 %v998
      %1032 = vmatprep.subr.mxu0 %v1001
      %1033 = vmatpush1.msra.mxu0 %v1000
      %1034 = vmatprep.subr.mxu0 %v1003
      %1035 = vmatpush1.msra.mxu0 %v1002
      %1036 = vmatprep.subr.mxu0 %v1005
      %1037 = vmatpush1.msra.mxu0 %v1004
      %1038 = vmatprep.subr.mxu0 %v1007
      %1039 = vmatpush1.msra.mxu0 %v1006
      %1040 = vmatprep.subr.mxu0 %v1009
      %1041 = vmatpush1.msra.mxu0 %v1008
      %1042 = vmatprep.subr.mxu0 0.0
      %1043 = vmatpush1.msra.mxu0 0.0
      %1044 = vmatprep.subr.mxu0 0.0
      %1045 = vmatpush1.msra.mxu0 0.0
      %1046 = vmatprep.subr.mxu0 0.0
      %1047 = vmatpush1.msra.mxu0 0.0
      %1048 = vmatprep.subr.mxu0 0.0
      %1049 = vmatpush1.msra.mxu0 0.0
      %1050 = vmatprep.subr.mxu0 0.0
      %1051 = vmatpush1.msra.mxu0 0.0
      %1052 = vmatprep.subr.mxu0 0.0
      %1053 = vmatpush1.msra.mxu0 0.0
      %1054 = vmatprep.subr.mxu0 0.0
      %1055 = vmatpush1.msra.mxu0 0.0
      %1056 = vmatprep.subr.mxu0 0.0
      %1057 = vmatpush1.msra.mxu0 0.0
      %1058 = vmatprep.subr.mxu0 0.0
      %1059 = vmatpush1.msra.mxu0 0.0
      %1060 = vmatprep.subr.mxu0 0.0
      %1061 = vmatpush1.msra.mxu0 0.0
      %1062 = vmatprep.subr.mxu0 0.0
      %1063 = vmatpush1.msra.mxu0 0.0
      %1064 = vmatprep.subr.mxu0 0.0
      %1065 = vmatpush1.msra.mxu0 0.0
      %1066 = vmatprep.subr.mxu0 0.0
      %1067 = vmatpush1.msra.mxu0 0.0
      %1068 = vmatprep.subr.mxu0 0.0
      %1069 = vmatpush1.msra.mxu0 0.0
      %1070 = vmatprep.subr.mxu0 0.0
      %1071 = vmatpush1.msra.mxu0 0.0
      %1072 = vmatprep.subr.mxu0 0.0
      %1073 = vmatpush1.msra.mxu0 0.0
      %1074 = vmatprep.mubr.f32.mxu0 0.0
      %1075 = vmatmul.mubr.f32.gmra.mrb[0].mxu0 %v977
      %v1076 = vpop.f32.mrb[0].mxu0
      %v1077 = vadd.f32 %v416, %v1076
      %v1078 = vpop.f32.mrb[0].mxu0
      %v1079 = vadd.f32 %v420, %v1078
      %1080 = vdwg.mxu0
      %v1081 = vxor.u32 %v1077, 2147483648
      %v1082 = vmul.f32 %v1081, 1.442695
      %v1083 = vpow.pop %v1082
      %v1084 = vadd.f32 %v1083, 1.0
      %v1085 = vrcp.pop %v1084
      %v1086 = vmul.f32 1.0, %v1085
      %v1087 = vmax.f32 %v1079, 0.0
      %v1088 = vld [vmem:[%s5] sm:$0xff]
      %v1089 = vld [vmem:[%s5 + $0x8] sm:$0xff]
      %v1090 = vld [vmem:[%s5 + $0x10] sm:$0xff]
      %v1091 = vld [vmem:[%s5 + $0x18] sm:$0xff]
      %v1092 = vld [vmem:[%s5 + $0x20] sm:$0xff]
      %v1093 = vld [vmem:[%s5 + $0x28] sm:$0xff]
      %v1094 = vld [vmem:[%s5 + $0x30] sm:$0xff]
      %v1095 = vld [vmem:[%s5 + $0x38] sm:$0xff]
      %v1096 = vld [vmem:[%s5 + $0x40] sm:$0xff]
      %v1097 = vld [vmem:[%s5 + $0x48] sm:$0xff]
      %v1098 = vld [vmem:[%s5 + $0x50] sm:$0xff]
      %v1099 = vld [vmem:[%s5 + $0x58] sm:$0xff]
      %v1100 = vld [vmem:[%s5 + $0x60] sm:$0xff]
      %v1101 = vld [vmem:[%s5 + $0x68] sm:$0xff]
      %v1102 = vld [vmem:[%s5 + $0x70] sm:$0xff]
      %v1103 = vld [vmem:[%s5 + $0x78] sm:$0xff]
      %1104 = vmatprep.subr.mxu0 0.0
      %1105 = vmatpush1.msra.mxu0 %v1088
      %1106 = vmatprep.subr.mxu0 0.0
      %1107 = vmatpush1.msra.mxu0 %v1089
      %1108 = vmatprep.subr.mxu0 0.0
      %1109 = vmatpush1.msra.mxu0 %v1090
      %1110 = vmatprep.subr.mxu0 0.0
      %1111 = vmatpush1.msra.mxu0 %v1091
      %1112 = vmatprep.subr.mxu0 0.0
      %1113 = vmatpush1.msra.mxu0 %v1092
      %1114 = vmatprep.subr.mxu0 0.0
      %1115 = vmatpush1.msra.mxu0 %v1093
      %1116 = vmatprep.subr.mxu0 0.0
      %1117 = vmatpush1.msra.mxu0 %v1094
      %1118 = vmatprep.subr.mxu0 0.0
      %1119 = vmatpush1.msra.mxu0 %v1095
      %1120 = vmatprep.subr.mxu0 0.0
      %1121 = vmatpush1.msra.mxu0 %v1096
      %1122 = vmatprep.subr.mxu0 0.0
      %1123 = vmatpush1.msra.mxu0 %v1097
      %1124 = vmatprep.subr.mxu0 0.0
      %1125 = vmatpush1.msra.mxu0 %v1098
      %1126 = vmatprep.subr.mxu0 0.0
      %1127 = vmatpush1.msra.mxu0 %v1099
      %1128 = vmatprep.subr.mxu0 0.0
      %1129 = vmatpush1.msra.mxu0 %v1100
      %1130 = vmatprep.subr.mxu0 0.0
      %1131 = vmatpush1.msra.mxu0 %v1101
      %1132 = vmatprep.subr.mxu0 0.0
      %1133 = vmatpush1.msra.mxu0 %v1102
      %1134 = vmatprep.subr.mxu0 0.0
      %1135 = vmatpush1.msra.mxu0 %v1103
      %1136 = vmatprep.subr.mxu0 0.0
      %1137 = vmatpush1.msra.mxu0 0.0
      %1138 = vmatprep.subr.mxu0 0.0
      %1139 = vmatpush1.msra.mxu0 0.0
      %1140 = vmatprep.subr.mxu0 0.0
      %1141 = vmatpush1.msra.mxu0 0.0
      %1142 = vmatprep.subr.mxu0 0.0
      %1143 = vmatpush1.msra.mxu0 0.0
      %1144 = vmatprep.subr.mxu0 0.0
      %1145 = vmatpush1.msra.mxu0 0.0
      %1146 = vmatprep.subr.mxu0 0.0
      %1147 = vmatpush1.msra.mxu0 0.0
      %1148 = vmatprep.subr.mxu0 0.0
      %1149 = vmatpush1.msra.mxu0 0.0
      %1150 = vmatprep.subr.mxu0 0.0
      %1151 = vmatpush1.msra.mxu0 0.0
      %1152 = vmatprep.subr.mxu0 0.0
      %1153 = vmatpush1.msra.mxu0 0.0
      %1154 = vmatprep.subr.mxu0 0.0
      %1155 = vmatpush1.msra.mxu0 0.0
      %1156 = vmatprep.subr.mxu0 0.0
      %1157 = vmatpush1.msra.mxu0 0.0
      %1158 = vmatprep.subr.mxu0 0.0
      %1159 = vmatpush1.msra.mxu0 0.0
      %1160 = vmatprep.subr.mxu0 0.0
      %1161 = vmatpush1.msra.mxu0 0.0
      %1162 = vmatprep.subr.mxu0 0.0
      %1163 = vmatpush1.msra.mxu0 0.0
      %1164 = vmatprep.subr.mxu0 0.0
      %1165 = vmatpush1.msra.mxu0 0.0
      %1166 = vmatprep.subr.mxu0 0.0
      %1167 = vmatpush1.msra.mxu0 0.0
      %1168 = vmatprep.mubr.f32.mxu0 0.0
      %1169 = vmatmul.mubr.f32.gmra.mrb[0].mxu0 %v1086
      %v1170 = vpop.f32.mrb[0].mxu0
      %v1171 = vadd.f32 %v521, %v1170
      %v1172 = vpop.f32.mrb[0].mxu0
      %1173 = vdwg.mxu0
      %v1174 = vtanh.pop %v1171
      %v1175 = vadd.f32 %v1087, %v1174
      %v1176 = vmul.f32 %v1175, 0.5
      %s1177 = scalar_lea.vmem %s280, 16
      %1178 = vst [vmem:[%s1177] sm:$0xff] %v1176
      %s1179 = scalar_lea.vmem %s274, 24
      %v1180 = vld [vmem:[%s1179] sm:$0xff]
      %v1181 = vld [vmem:[%s2] sm:$0xff]
      %v1182 = vld [vmem:[%s2 + $0x8] sm:$0xff]
      %v1183 = vld [vmem:[%s2 + $0x10] sm:$0xff]
      %v1184 = vld [vmem:[%s2 + $0x18] sm:$0xff]
      %v1185 = vld [vmem:[%s2 + $0x20] sm:$0xff]
      %v1186 = vld [vmem:[%s2 + $0x28] sm:$0xff]
      %v1187 = vld [vmem:[%s2 + $0x30] sm:$0xff]
      %v1188 = vld [vmem:[%s2 + $0x38] sm:$0xff]
      %v1189 = vld [vmem:[%s2 + $0x40] sm:$0xff]
      %v1190 = vld [vmem:[%s2 + $0x48] sm:$0xff]
      %v1191 = vld [vmem:[%s2 + $0x50] sm:$0xff]
      %v1192 = vld [vmem:[%s2 + $0x58] sm:$0xff]
      %v1193 = vld [vmem:[%s2 + $0x60] sm:$0xff]
      %v1194 = vld [vmem:[%s2 + $0x68] sm:$0xff]
      %v1195 = vld [vmem:[%s2 + $0x70] sm:$0xff]
      %v1196 = vld [vmem:[%s2 + $0x78] sm:$0xff]
      %1197 = vmatprep.subr.mxu0 0.0
      %1198 = vmatpush1.msra.mxu0 %v1181
      %1199 = vmatprep.subr.mxu0 0.0
      %1200 = vmatpush1.msra.mxu0 %v1182
      %1201 = vmatprep.subr.mxu0 0.0
      %1202 = vmatpush1.msra.mxu0 %v1183
      %1203 = vmatprep.subr.mxu0 0.0
      %1204 = vmatpush1.msra.mxu0 %v1184
      %1205 = vmatprep.subr.mxu0 0.0
      %1206 = vmatpush1.msra.mxu0 %v1185
      %1207 = vmatprep.subr.mxu0 0.0
      %1208 = vmatpush1.msra.mxu0 %v1186
      %1209 = vmatprep.subr.mxu0 0.0
      %1210 = vmatpush1.msra.mxu0 %v1187
      %1211 = vmatprep.subr.mxu0 0.0
      %1212 = vmatpush1.msra.mxu0 %v1188
      %1213 = vmatprep.subr.mxu0 0.0
      %1214 = vmatpush1.msra.mxu0 %v1189
      %1215 = vmatprep.subr.mxu0 0.0
      %1216 = vmatpush1.msra.mxu0 %v1190
      %1217 = vmatprep.subr.mxu0 0.0
      %1218 = vmatpush1.msra.mxu0 %v1191
      %1219 = vmatprep.subr.mxu0 0.0
      %1220 = vmatpush1.msra.mxu0 %v1192
      %1221 = vmatprep.subr.mxu0 0.0
      %1222 = vmatpush1.msra.mxu0 %v1193
      %1223 = vmatprep.subr.mxu0 0.0
      %1224 = vmatpush1.msra.mxu0 %v1194
      %1225 = vmatprep.subr.mxu0 0.0
      %1226 = vmatpush1.msra.mxu0 %v1195
      %1227 = vmatprep.subr.mxu0 0.0
      %1228 = vmatpush1.msra.mxu0 %v1196
      %1229 = vmatprep.subr.mxu0 0.0
      %1230 = vmatpush1.msra.mxu0 0.0
      %1231 = vmatprep.subr.mxu0 0.0
      %1232 = vmatpush1.msra.mxu0 0.0
      %1233 = vmatprep.subr.mxu0 0.0
      %1234 = vmatpush1.msra.mxu0 0.0
      %1235 = vmatprep.subr.mxu0 0.0
      %1236 = vmatpush1.msra.mxu0 0.0
      %1237 = vmatprep.subr.mxu0 0.0
      %1238 = vmatpush1.msra.mxu0 0.0
      %1239 = vmatprep.subr.mxu0 0.0
      %1240 = vmatpush1.msra.mxu0 0.0
      %1241 = vmatprep.subr.mxu0 0.0
      %1242 = vmatpush1.msra.mxu0 0.0
      %1243 = vmatprep.subr.mxu0 0.0
      %1244 = vmatpush1.msra.mxu0 0.0
      %1245 = vmatprep.subr.mxu0 0.0
      %1246 = vmatpush1.msra.mxu0 0.0
      %1247 = vmatprep.subr.mxu0 0.0
      %1248 = vmatpush1.msra.mxu0 0.0
      %1249 = vmatprep.subr.mxu0 0.0
      %1250 = vmatpush1.msra.mxu0 0.0
      %1251 = vmatprep.subr.mxu0 0.0
      %1252 = vmatpush1.msra.mxu0 0.0
      %1253 = vmatprep.subr.mxu0 0.0
      %1254 = vmatpush1.msra.mxu0 0.0
      %1255 = vmatprep.subr.mxu0 0.0
      %1256 = vmatpush1.msra.mxu0 0.0
      %1257 = vmatprep.subr.mxu0 0.0
      %1258 = vmatpush1.msra.mxu0 0.0
      %1259 = vmatprep.subr.mxu0 0.0
      %1260 = vmatpush1.msra.mxu0 0.0
      %1261 = vmatprep.mubr.f32.mxu0 0.0
      %1262 = vmatmul.mubr.f32.gmra.mrb[0].mxu0 %v1176
      %v1263 = vpop.f32.mrb[0].mxu0
      %v1264 = vadd.f32 0.0, %v1263
      %v1265 = vpop.f32.mrb[0].mxu0
      %1266 = vdwg.mxu0
      %v1267 = vadd.f32 %v1180, %v1264
      %v1268 = vtanh.pop %v1267
      %v1269 = vld [vmem:[%s3] sm:$0xff]
      %v1270 = vld [vmem:[%s3 + $0x8] sm:$0xff]
      %v1271 = vld [vmem:[%s3 + $0x10] sm:$0xff]
      %v1272 = vld [vmem:[%s3 + $0x18] sm:$0xff]
      %v1273 = vld [vmem:[%s3 + $0x20] sm:$0xff]
      %v1274 = vld [vmem:[%s3 + $0x28] sm:$0xff]
      %v1275 = vld [vmem:[%s3 + $0x30] sm:$0xff]
      %v1276 = vld [vmem:[%s3 + $0x38] sm:$0xff]
      %v1277 = vld [vmem:[%s3 + $0x40] sm:$0xff]
      %v1278 = vld [vmem:[%s3 + $0x48] sm:$0xff]
      %v1279 = vld [vmem:[%s3 + $0x50] sm:$0xff]
      %v1280 = vld [vmem:[%s3 + $0x58] sm:$0xff]
      %v1281 = vld [vmem:[%s3 + $0x60] sm:$0xff]
      %v1282 = vld [vmem:[%s3 + $0x68] sm:$0xff]
      %v1283 = vld [vmem:[%s3 + $0x70] sm:$0xff]
      %v1284 = vld [vmem:[%s3 + $0x78] sm:$0xff]
      %v1285 = vld [vmem:[%s3 + $0x80] sm:$0xff]
      %v1286 = vld [vmem:[%s3 + $0x88] sm:$0xff]
      %v1287 = vld [vmem:[%s3 + $0x90] sm:$0xff]
      %v1288 = vld [vmem:[%s3 + $0x98] sm:$0xff]
      %v1289 = vld [vmem:[%s3 + $0xa0] sm:$0xff]
      %v1290 = vld [vmem:[%s3 + $0xa8] sm:$0xff]
      %v1291 = vld [vmem:[%s3 + $0xb0] sm:$0xff]
      %v1292 = vld [vmem:[%s3 + $0xb8] sm:$0xff]
      %v1293 = vld [vmem:[%s3 + $0xc0] sm:$0xff]
      %v1294 = vld [vmem:[%s3 + $0xc8] sm:$0xff]
      %v1295 = vld [vmem:[%s3 + $0xd0] sm:$0xff]
      %v1296 = vld [vmem:[%s3 + $0xd8] sm:$0xff]
      %v1297 = vld [vmem:[%s3 + $0xe0] sm:$0xff]
      %v1298 = vld [vmem:[%s3 + $0xe8] sm:$0xff]
      %v1299 = vld [vmem:[%s3 + $0xf0] sm:$0xff]
      %v1300 = vld [vmem:[%s3 + $0xf8] sm:$0xff]
      %1301 = vmatprep.subr.mxu0 %v1270
      %1302 = vmatpush1.msra.mxu0 %v1269
      %1303 = vmatprep.subr.mxu0 %v1272
      %1304 = vmatpush1.msra.mxu0 %v1271
      %1305 = vmatprep.subr.mxu0 %v1274
      %1306 = vmatpush1.msra.mxu0 %v1273
      %1307 = vmatprep.subr.mxu0 %v1276
      %1308 = vmatpush1.msra.mxu0 %v1275
      %1309 = vmatprep.subr.mxu0 %v1278
      %1310 = vmatpush1.msra.mxu0 %v1277
      %1311 = vmatprep.subr.mxu0 %v1280
      %1312 = vmatpush1.msra.mxu0 %v1279
      %1313 = vmatprep.subr.mxu0 %v1282
      %1314 = vmatpush1.msra.mxu0 %v1281
      %1315 = vmatprep.subr.mxu0 %v1284
      %1316 = vmatpush1.msra.mxu0 %v1283
      %1317 = vmatprep.subr.mxu0 %v1286
      %1318 = vmatpush1.msra.mxu0 %v1285
      %1319 = vmatprep.subr.mxu0 %v1288
      %1320 = vmatpush1.msra.mxu0 %v1287
      %1321 = vmatprep.subr.mxu0 %v1290
      %1322 = vmatpush1.msra.mxu0 %v1289
      %1323 = vmatprep.subr.mxu0 %v1292
      %1324 = vmatpush1.msra.mxu0 %v1291
      %1325 = vmatprep.subr.mxu0 %v1294
      %1326 = vmatpush1.msra.mxu0 %v1293
      %1327 = vmatprep.subr.mxu0 %v1296
      %1328 = vmatpush1.msra.mxu0 %v1295
      %1329 = vmatprep.subr.mxu0 %v1298
      %1330 = vmatpush1.msra.mxu0 %v1297
      %1331 = vmatprep.subr.mxu0 %v1300
      %1332 = vmatpush1.msra.mxu0 %v1299
      %1333 = vmatprep.subr.mxu0 0.0
      %1334 = vmatpush1.msra.mxu0 0.0
      %1335 = vmatprep.subr.mxu0 0.0
      %1336 = vmatpush1.msra.mxu0 0.0
      %1337 = vmatprep.subr.mxu0 0.0
      %1338 = vmatpush1.msra.mxu0 0.0
      %1339 = vmatprep.subr.mxu0 0.0
      %1340 = vmatpush1.msra.mxu0 0.0
      %1341 = vmatprep.subr.mxu0 0.0
      %1342 = vmatpush1.msra.mxu0 0.0
      %1343 = vmatprep.subr.mxu0 0.0
      %1344 = vmatpush1.msra.mxu0 0.0
      %1345 = vmatprep.subr.mxu0 0.0
      %1346 = vmatpush1.msra.mxu0 0.0
      %1347 = vmatprep.subr.mxu0 0.0
      %1348 = vmatpush1.msra.mxu0 0.0
      %1349 = vmatprep.subr.mxu0 0.0
      %1350 = vmatpush1.msra.mxu0 0.0
      %1351 = vmatprep.subr.mxu0 0.0
      %1352 = vmatpush1.msra.mxu0 0.0
      %1353 = vmatprep.subr.mxu0 0.0
      %1354 = vmatpush1.msra.mxu0 0.0
      %1355 = vmatprep.subr.mxu0 0.0
      %1356 = vmatpush1.msra.mxu0 0.0
      %1357 = vmatprep.subr.mxu0 0.0
      %1358 = vmatpush1.msra.mxu0 0.0
      %1359 = vmatprep.subr.mxu0 0.0
      %1360 = vmatpush1.msra.mxu0 0.0
      %1361 = vmatprep.subr.mxu0 0.0
      %1362 = vmatpush1.msra.mxu0 0.0
      %1363 = vmatprep.subr.mxu0 0.0
      %1364 = vmatpush1.msra.mxu0 0.0
      %1365 = vmatprep.mubr.f32.mxu0 0.0
      %1366 = vmatmul.mubr.f32.gmra.mrb[0].mxu0 %v1268
      %v1367 = vpop.f32.mrb[0].mxu0
      %v1368 = vadd.f32 %v416, %v1367
      %v1369 = vpop.f32.mrb[0].mxu0
      %v1370 = vadd.f32 %v420, %v1369
      %1371 = vdwg.mxu0
      %v1372 = vxor.u32 %v1368, 2147483648
      %v1373 = vmul.f32 %v1372, 1.442695
      %v1374 = vpow.pop %v1373
      %v1375 = vadd.f32 %v1374, 1.0
      %v1376 = vrcp.pop %v1375
      %v1377 = vmul.f32 1.0, %v1376
      %v1378 = vmax.f32 %v1370, 0.0
      %v1379 = vld [vmem:[%s5] sm:$0xff]
      %v1380 = vld [vmem:[%s5 + $0x8] sm:$0xff]
      %v1381 = vld [vmem:[%s5 + $0x10] sm:$0xff]
      %v1382 = vld [vmem:[%s5 + $0x18] sm:$0xff]
      %v1383 = vld [vmem:[%s5 + $0x20] sm:$0xff]
      %v1384 = vld [vmem:[%s5 + $0x28] sm:$0xff]
      %v1385 = vld [vmem:[%s5 + $0x30] sm:$0xff]
      %v1386 = vld [vmem:[%s5 + $0x38] sm:$0xff]
      %v1387 = vld [vmem:[%s5 + $0x40] sm:$0xff]
      %v1388 = vld [vmem:[%s5 + $0x48] sm:$0xff]
      %v1389 = vld [vmem:[%s5 + $0x50] sm:$0xff]
      %v1390 = vld [vmem:[%s5 + $0x58] sm:$0xff]
      %v1391 = vld [vmem:[%s5 + $0x60] sm:$0xff]
      %v1392 = vld [vmem:[%s5 + $0x68] sm:$0xff]
      %v1393 = vld [vmem:[%s5 + $0x70] sm:$0xff]
      %v1394 = vld [vmem:[%s5 + $0x78] sm:$0xff]
      %1395 = vmatprep.subr.mxu0 0.0
      %1396 = vmatpush1.msra.mxu0 %v1379
      %1397 = vmatprep.subr.mxu0 0.0
      %1398 = vmatpush1.msra.mxu0 %v1380
      %1399 = vmatprep.subr.mxu0 0.0
      %1400 = vmatpush1.msra.mxu0 %v1381
      %1401 = vmatprep.subr.mxu0 0.0
      %1402 = vmatpush1.msra.mxu0 %v1382
      %1403 = vmatprep.subr.mxu0 0.0
      %1404 = vmatpush1.msra.mxu0 %v1383
      %1405 = vmatprep.subr.mxu0 0.0
      %1406 = vmatpush1.msra.mxu0 %v1384
      %1407 = vmatprep.subr.mxu0 0.0
      %1408 = vmatpush1.msra.mxu0 %v1385
      %1409 = vmatprep.subr.mxu0 0.0
      %1410 = vmatpush1.msra.mxu0 %v1386
      %1411 = vmatprep.subr.mxu0 0.0
      %1412 = vmatpush1.msra.mxu0 %v1387
      %1413 = vmatprep.subr.mxu0 0.0
      %1414 = vmatpush1.msra.mxu0 %v1388
      %1415 = vmatprep.subr.mxu0 0.0
      %1416 = vmatpush1.msra.mxu0 %v1389
      %1417 = vmatprep.subr.mxu0 0.0
      %1418 = vmatpush1.msra.mxu0 %v1390
      %1419 = vmatprep.subr.mxu0 0.0
      %1420 = vmatpush1.msra.mxu0 %v1391
      %1421 = vmatprep.subr.mxu0 0.0
      %1422 = vmatpush1.msra.mxu0 %v1392
      %1423 = vmatprep.subr.mxu0 0.0
      %1424 = vmatpush1.msra.mxu0 %v1393
      %1425 = vmatprep.subr.mxu0 0.0
      %1426 = vmatpush1.msra.mxu0 %v1394
      %1427 = vmatprep.subr.mxu0 0.0
      %1428 = vmatpush1.msra.mxu0 0.0
      %1429 = vmatprep.subr.mxu0 0.0
      %1430 = vmatpush1.msra.mxu0 0.0
      %1431 = vmatprep.subr.mxu0 0.0
      %1432 = vmatpush1.msra.mxu0 0.0
      %1433 = vmatprep.subr.mxu0 0.0
      %1434 = vmatpush1.msra.mxu0 0.0
      %1435 = vmatprep.subr.mxu0 0.0
      %1436 = vmatpush1.msra.mxu0 0.0
      %1437 = vmatprep.subr.mxu0 0.0
      %1438 = vmatpush1.msra.mxu0 0.0
      %1439 = vmatprep.subr.mxu0 0.0
      %1440 = vmatpush1.msra.mxu0 0.0
      %1441 = vmatprep.subr.mxu0 0.0
      %1442 = vmatpush1.msra.mxu0 0.0
      %1443 = vmatprep.subr.mxu0 0.0
      %1444 = vmatpush1.msra.mxu0 0.0
      %1445 = vmatprep.subr.mxu0 0.0
      %1446 = vmatpush1.msra.mxu0 0.0
      %1447 = vmatprep.subr.mxu0 0.0
      %1448 = vmatpush1.msra.mxu0 0.0
      %1449 = vmatprep.subr.mxu0 0.0
      %1450 = vmatpush1.msra.mxu0 0.0
      %1451 = vmatprep.subr.mxu0 0.0
      %1452 = vmatpush1.msra.mxu0 0.0
      %1453 = vmatprep.subr.mxu0 0.0
      %1454 = vmatpush1.msra.mxu0 0.0
      %1455 = vmatprep.subr.mxu0 0.0
      %1456 = vmatpush1.msra.mxu0 0.0
      %1457 = vmatprep.subr.mxu0 0.0
      %1458 = vmatpush1.msra.mxu0 0.0
      %1459 = vmatprep.mubr.f32.mxu0 0.0
      %1460 = vmatmul.mubr.f32.gmra.mrb[0].mxu0 %v1377
      %v1461 = vpop.f32.mrb[0].mxu0
      %v1462 = vadd.f32 %v521, %v1461
      %v1463 = vpop.f32.mrb[0].mxu0
      %1464 = vdwg.mxu0
      %v1465 = vtanh.pop %v1462
      %v1466 = vadd.f32 %v1378, %v1465
      %v1467 = vmul.f32 %v1466, 0.5
      %s1468 = scalar_lea.vmem %s280, 24
      %1469 = vst [vmem:[%s1468] sm:$0xff] %v1467
      %1470 = vst [vmem:[#allocation2] sm:$0xff] %v1467
      %s1471 = smul.u32 4, %s18
      %p1472 = scmp.lt.s32.totalorder %s1471, 7
      %s1473 = scalar_select %p1472, %s1471, 7
      %s1474 = smul.addr %s1473, 8
      %s1475 = scalar_lea.vmem %s7, %s1474
      // Predicated region
      $region53: #{rnn_search_forward.1} parent=47 // pred_check
        %p1476 = pneg %p188
      $region54: #{rnn_search_forward.1} parent=47 // pred_check_branch
        %1478 = sbr.rel (%p1476) target = $region56
      $region55: #{rnn_search_forward.1} parent=47 // pred_region
        %s1479 = smul.u32 4, %s18
      $region56: #{rnn_search_forward.1} parent=47 // pred_fallthru
        _
    $region48: #{rnn_search_forward.1} parent=5 // pred_fallthru
      _
    %p1480 = scmp.le.s32.totalorder 2, %s13
    // Predicated region
    $region57: #{rnn_search_forward.1} parent=5 // pred_check
      %p1481 = pneg %p1480
    $region58: #{rnn_search_forward.1} parent=5 // pred_check_branch
      %1483 = sbr.rel (%p1481) target = $region60
    $region59: #{rnn_search_forward.1} parent=5 // pred_region
      %s1484 = ssub.s32 %s13, 2
      // Predicated region
      $region61: #{rnn_search_forward.1} parent=59 // pred_check
        %p1485 = pneg %p194
      $region62: #{rnn_search_forward.1} parent=59 // pred_check_branch
        %1487 = sbr.rel (%p1485) target = $region64
      $region63: #{rnn_search_forward.1} parent=59 // pred_region
        %s1488 = smul.u32 4, %s19
        %p1489 = scmp.lt.s32.totalorder %s1488, 7
        %s1490 = scalar_select %p1489, %s1488, 7
        %s1491 = smul.addr %s1490, 8
        %s1492 = scalar_lea.vmem %s7, %s1491
      $region64: #{rnn_search_forward.1} parent=59 // pred_fallthru
        _
    $region60: #{rnn_search_forward.1} parent=5 // pred_fallthru
      _
  $region6: #{rnn_search_forward.1} parent=0 // loop_footer
    %s17 = sadd.s32 1, %s13
  $region7: #{rnn_search_forward.1} parent=0 // loop_footer_branch
    %12 = sbr.rel target = $region3
  $region8: #{rnn_search_forward.1} parent=0 // loop_exit
    _

</llo_original>
